<compile_context>
chip_gen: v7x
topology: tpu7x:2x2x1
jax: 0.10.0
libtpu: 0.0.40
codegen_flags: <defaults>
</compile_context>

<pallas_src>
from functools import partial

import jax
import jax.numpy as jnp
from jax import lax
from jax.experimental import pallas as pl
from jax.experimental.pallas import tpu as pltpu


# --------------------------------------------------------------------------- #
# helpers
# --------------------------------------------------------------------------- #

def _round_up(n, m):
    return ((n + m - 1) // m) * m


def _pick_attn_tiles(T):
    """Return (tq, tk); tq | tk and both multiples of 8."""
    if T >= 1024:          # Whisper-encoder scale (T=1500 -> pad to 1536)
        return 256, 512
    if T >= 256:
        return 128, 256
    if T >= 128:
        return 128, 128
    # tiny / unit-test sizes: keep >= 8 for the sublane rule, and try to get
    # at least two kv tiles so the online-softmax path is exercised.
    t = _round_up(T, 8)
    if t >= 16:
        half = _round_up(t // 2, 8)
        return half, half
    return t, t


def _pick_mlp_chunk(n_mlp):
    for c in (512, 256, 128):
        if n_mlp % c == 0 and n_mlp > c:
            return c
    return n_mlp


def _vmem_limit_bytes():
    """Physical VMEM minus headroom (generation-aware), clamped to sane range."""
    mib = 1024 * 1024
    try:
        cap = int(pltpu.get_tpu_info().vmem_capacity_bytes)
    except Exception:
        return 64 * mib
    return int(max(32 * mib, min(cap - 8 * mib, 120 * mib)))


def _layer_norm(x, g, b, eps=1e-5):
    # matches nn.LayerNorm(n_state) computed in float32 (biased variance)
    xf = x.astype(jnp.float32)
    mu = jnp.mean(xf, axis=-1, keepdims=True)
    var = jnp.mean((xf - mu) ** 2, axis=-1, keepdims=True)
    return (xf - mu) * lax.rsqrt(var + eps) * g + b


def _const_spec(shape):
    # same block for every grid step (resident weights / params)
    return pl.BlockSpec(shape, lambda *_: (0,) * len(shape))


# --------------------------------------------------------------------------- #
# kernel 1: LayerNorm + fused QKV projection (once per token, head-major out)
# --------------------------------------------------------------------------- #

def _ln_qkv_kernel(x_ref, g_ref, b_ref, wq_ref, bq_ref, wk_ref, wv_ref, bv_ref,
                   q_ref, k_ref, v_ref, *, n_head, scale):
    tt, D = x_ref.shape[1], x_ref.shape[2]
    H = n_head
    dh = D // H

    xn = _layer_norm(x_ref[0], g_ref[0], b_ref[0]).astype(jnp.bfloat16)   # (tt, D)
    q = jnp.dot(xn, wq_ref[...], preferred_element_type=jnp.float32) + bq_ref[0]
    k = jnp.dot(xn, wk_ref[...], preferred_element_type=jnp.float32)     # no bias
    v = jnp.dot(xn, wv_ref[...], preferred_element_type=jnp.float32) + bv_ref[0]
    q = q * scale   # full 1/sqrt(dh) folded into Q (K left unscaled)

    # head-major so the flash loop never transposes (transpose cost is paid
    # once per token here, not once per (q-tile, kv-tile) pair)
    q_ref[0] = q.reshape(tt, H, dh).transpose(1, 0, 2).astype(q_ref.dtype)
    k_ref[0] = k.reshape(tt, H, dh).transpose(1, 0, 2).astype(k_ref.dtype)
    v_ref[0] = v.reshape(tt, H, dh).transpose(1, 0, 2).astype(v_ref.dtype)


# --------------------------------------------------------------------------- #
# kernel 2: flash attention (online softmax) + out projection + residual
# --------------------------------------------------------------------------- #

def _flash_attn_kernel(x_ref, q_ref, k_ref, v_ref, wo_ref, bo_ref, o_ref,
                       m_scr, l_scr, acc_scr, *, t_real, tk, need_mask):
    kt = pl.program_id(2)
    n_kt = pl.num_programs(2)

    @pl.when(kt == 0)
    def _init():
        m_scr[...] = jnp.full(m_scr.shape, -1e30, jnp.float32)
        l_scr[...] = jnp.zeros(l_scr.shape, jnp.float32)
        acc_scr[...] = jnp.zeros(acc_scr.shape, jnp.float32)

    qh = q_ref[0]                       # (H, tq, dh) bf16, pre-scaled
    kh = k_ref[0]                       # (H, tk, dh) bf16
    vh = v_ref[0]                       # (H, tk, dh) bf16

    s = jnp.einsum("hqd,hkd->hqk", qh, kh,
                   preferred_element_type=jnp.float32)                   # (H, tq, tk)

    if need_mask:                       # static python bool (only when T was padded)
        col = kt * tk + lax.broadcasted_iota(jnp.int32, s.shape[1:], 1)  # (tq, tk)
        s = jnp.where((col < t_real)[None], s, jnp.float32(-1e30))

    m_prev = m_scr[...]
    m_new = jnp.maximum(m_prev, jnp.max(s, axis=-1, keepdims=True))
    alpha = jnp.exp(m_prev - m_new)
    p = jnp.exp(s - m_new)
    l_scr[...] = alpha * l_scr[...] + jnp.sum(p, axis=-1, keepdims=True)
    acc_scr[...] = alpha * acc_scr[...] + jnp.einsum(
        "hqk,hkd->hqd", p.astype(jnp.bfloat16), vh,
        preferred_element_type=jnp.float32)
    m_scr[...] = m_new

    @pl.when(kt == n_kt - 1)
    def _finalize():
        H, tq, dh = acc_scr.shape
        inv_l = pl.reciprocal(l_scr[...], approx=True)                   # EUP slot
        ctx = (acc_scr[...] * inv_l).transpose(1, 0, 2).reshape(tq, H * dh)
        attn = jnp.dot(ctx.astype(jnp.bfloat16), wo_ref[...],
                       preferred_element_type=jnp.float32) + bo_ref[0]
        o_ref[0] = (x_ref[0].astype(jnp.float32) + attn).astype(o_ref.dtype)


# --------------------------------------------------------------------------- #
# kernel 3: LayerNorm2 + chunked MLP (exact GELU) + residual
# --------------------------------------------------------------------------- #

def _mlp_kernel(x_ref, g_ref, b_ref, w1_ref, b1_ref, w2_ref, b2_ref, o_ref,
                xn_scr, acc_scr):
    c = pl.program_id(2)
    nc = pl.num_programs(2)

    @pl.when(c == 0)
    def _init():
        xn_scr[...] = _layer_norm(x_ref[0], g_ref[0], b_ref[0]).astype(xn_scr.dtype)
        acc_scr[...] = jnp.zeros(acc_scr.shape, jnp.float32)

    h = jnp.dot(xn_scr[...], w1_ref[...],
                preferred_element_type=jnp.float32) + b1_ref[0]           # (tt, mc)
    h = jax.nn.gelu(h, approximate=False)                                 # exact erf GELU
    acc_scr[...] += jnp.dot(h.astype(jnp.bfloat16), w2_ref[...],
                            preferred_element_type=jnp.float32)

    @pl.when(c == nc - 1)
    def _finalize():
        # TODO(synk): nn.Dropout(0.1) is treated as eval-mode identity (no RNG mask).
        o_ref[0] = (x_ref[0].astype(jnp.float32) + acc_scr[...]
                    + b2_ref[0]).astype(o_ref.dtype)


# --------------------------------------------------------------------------- #
# wrapper
# --------------------------------------------------------------------------- #

def residual_attention_block(x, params, *, n_head):
    B, T, D = x.shape
    assert D % n_head == 0
    H = n_head
    dh = D // H
    n_mlp = params["w1"].shape[1]

    tq, tk = _pick_attn_tiles(T)
    Tp = _round_up(T, tk)                 # tq | tk  =>  tq | Tp as well
    need_mask = Tp != T
    tt = tq                               # token tile for projection / MLP calls
    mc = _pick_mlp_chunk(n_mlp)

    xp = x if Tp == T else jnp.pad(x, ((0, 0), (0, Tp - T), (0, 0)))

    vmem_limit = _vmem_limit_bytes()
    cparams2 = pltpu.CompilerParams(
        dimension_semantics=("parallel", "parallel"),
        vmem_limit_bytes=vmem_limit)
    cparams3 = pltpu.CompilerParams(
        dimension_semantics=("parallel", "parallel", "arbitrary"),
        vmem_limit_bytes=vmem_limit)

    # ---- call 1: LayerNorm + fused QKV projection (head-major outputs) ----
    qkv_shape = jax.ShapeDtypeStruct((B, H, Tp, dh), jnp.bfloat16)
    hm_spec = pl.BlockSpec((1, H, tt, dh), lambda b, i: (b, 0, i, 0))
    q, k, v = pl.pallas_call(
        partial(_ln_qkv_kernel, n_head=H, scale=dh ** -0.5),
        out_shape=(qkv_shape, qkv_shape, qkv_shape),
        grid_spec=pltpu.PrefetchScalarGridSpec(
            num_scalar_prefetch=0,
            grid=(B, Tp // tt),
            in_specs=[
                pl.BlockSpec((1, tt, D), lambda b, i: (b, i, 0)),
                _const_spec((1, D)), _const_spec((1, D)),     # ln1 gamma, beta
                _const_spec((D, D)), _const_spec((1, D)),     # Wq, bq
                _const_spec((D, D)),                          # Wk (no bias)
                _const_spec((D, D)), _const_spec((1, D)),     # Wv, bv
            ],
            out_specs=(hm_spec, hm_spec, hm_spec),
        ),
        compiler_params=cparams2,
    )(xp, params["ln1_g"], params["ln1_b"],
      params["wq"], params["bq"], params["wk"], params["wv"], params["bv"])

    # ---- call 2: flash attention + output projection + residual ----
    x1 = pl.pallas_call(
        partial(_flash_attn_kernel, t_real=T, tk=tk, need_mask=need_mask),
        out_shape=jax.ShapeDtypeStruct((B, Tp, D), jnp.float32),
        grid_spec=pltpu.PrefetchScalarGridSpec(
            num_scalar_prefetch=0,
            grid=(B, Tp // tq, Tp // tk),
            in_specs=[
                pl.BlockSpec((1, tq, D), lambda b, i, kt_: (b, i, 0)),        # residual x
                pl.BlockSpec((1, H, tq, dh), lambda b, i, kt_: (b, 0, i, 0)),  # Q
                pl.BlockSpec((1, H, tk, dh), lambda b, i, kt_: (b, 0, kt_, 0)),  # K
                pl.BlockSpec((1, H, tk, dh), lambda b, i, kt_: (b, 0, kt_, 0)),  # V
                _const_spec((D, D)), _const_spec((1, D)),                      # Wo, bo
            ],
            out_specs=pl.BlockSpec((1, tq, D), lambda b, i, kt_: (b, i, 0)),
            scratch_shapes=[
                pltpu.VMEM((H, tq, 1), jnp.float32),    # running max m
                pltpu.VMEM((H, tq, 1), jnp.float32),    # running denom l
                pltpu.VMEM((H, tq, dh), jnp.float32),   # running numerator
            ],
        ),
        compiler_params=cparams3,
    )(xp, q, k, v, params["wo"], params["bo"])

    # ---- call 3: LayerNorm2 + chunked MLP + residual ----
    out = pl.pallas_call(
        _mlp_kernel,
        out_shape=jax.ShapeDtypeStruct((B, Tp, D), x.dtype),
        grid_spec=pltpu.PrefetchScalarGridSpec(
            num_scalar_prefetch=0,
            grid=(B, Tp // tt, n_mlp // mc),
            in_specs=[
                pl.BlockSpec((1, tt, D), lambda b, i, c: (b, i, 0)),   # x1
                _const_spec((1, D)), _const_spec((1, D)),              # ln2 gamma, beta
                pl.BlockSpec((D, mc), lambda b, i, c: (0, c)),         # W1 chunk
                pl.BlockSpec((1, mc), lambda b, i, c: (0, c)),         # b1 chunk
                pl.BlockSpec((mc, D), lambda b, i, c: (c, 0)),         # W2 chunk
                _const_spec((1, D)),                                   # b2
            ],
            out_specs=pl.BlockSpec((1, tt, D), lambda b, i, c: (b, i, 0)),
            scratch_shapes=[
                pltpu.VMEM((tt, D), jnp.bfloat16),   # cached LN2(x1)
                pltpu.VMEM((tt, D), jnp.float32),    # MLP accumulator
            ],
        ),
        compiler_params=cparams3,
    )(x1, params["ln2_g"], params["ln2_b"],
      params["w1"], params["b1"], params["w2"], params["b2"])

    return out if Tp == T else out[:, :T, :]


# --------------------------------------------------------------------------- #
# pure-JAX reference (mirrors the PyTorch forward in f32, eval mode)
# --------------------------------------------------------------------------- #

def reference_block(x, p, *, n_head):
    def ln(y, g, b, eps=1e-5):
        mu = y.mean(-1, keepdims=True)
        var = ((y - mu) ** 2).mean(-1, keepdims=True)
        return (y - mu) / jnp.sqrt(var + eps) * g + b

    f32 = jnp.float32
    B, T, D = x.shape
    dh = D // n_head
    scale = dh ** -0.25

    wq, wk, wv, wo = (p[k].astype(f32) for k in ("wq", "wk", "wv", "wo"))
    w1, w2 = p["w1"].astype(f32), p["w2"].astype(f32)

    xn = ln(x, p["ln1_g"], p["ln1_b"])
    q = xn @ wq + p["bq"]
    k = xn @ wk
    v = xn @ wv + p["bv"]
    q = q.reshape(B, T, n_head, dh).transpose(0, 2, 1, 3) * scale
    k = k.reshape(B, T, n_head, dh).transpose(0, 2, 3, 1) * scale
    v = v.reshape(B, T, n_head, dh).transpose(0, 2, 1, 3)
    w = jax.nn.softmax(jnp.einsum("bhtd,bhds->bhts", q, k), axis=-1)
    ctx = jnp.einsum("bhts,bhsd->bhtd", w, v).transpose(0, 2, 1, 3).reshape(B, T, D)
    x1 = x + ctx @ wo + p["bo"]

    xn2 = ln(x1, p["ln2_g"], p["ln2_b"])
    h = jax.nn.gelu(xn2 @ w1 + p["b1"], approximate=False)
    return x1 + h @ w2 + p["b2"]


def init_params(key, n_state, n_mlp):
    ks = jax.random.split(key, 8)
    s = 0.02

    def w(k, shape):
        return (s * jax.random.normal(k, shape, jnp.float32)).astype(jnp.bfloat16)

    return {
        "ln1_g": jnp.ones((1, n_state), jnp.float32),
        "ln1_b": jnp.zeros((1, n_state), jnp.float32),
        "wq": w(ks[0], (n_state, n_state)),
        "bq": s * jax.random.normal(ks[1], (1, n_state), jnp.float32),
        "wk": w(ks[2], (n_state, n_state)),
        "wv": w(ks[3], (n_state, n_state)),
        "bv": s * jax.random.normal(ks[4], (1, n_state), jnp.float32),
        "wo": w(ks[5], (n_state, n_state)),
        "bo": jnp.zeros((1, n_state), jnp.float32),
        "ln2_g": jnp.ones((1, n_state), jnp.float32),
        "ln2_b": jnp.zeros((1, n_state), jnp.float32),
        "w1": w(ks[6], (n_state, n_mlp)),
        "b1": jnp.zeros((1, n_mlp), jnp.float32),
        "w2": w(ks[7], (n_mlp, n_state)),
        "b2": jnp.zeros((1, n_state), jnp.float32),
    }


if __name__ == "__main__":
    # small shapes; T=24 is deliberately NOT a tile multiple so the padding +
    # key-mask + multi-kv-tile online-softmax paths are exercised.
    B, T, D, H = 2, 24, 32, 4          # batch, seq, n_state, n_head
    key = jax.random.PRNGKey(0)
    kx, kp = jax.random.split(key)
    x = jax.random.normal(kx, (B, T, D), jnp.float32)
    params = init_params(kp, D, 4 * D)

    out = residual_attention_block(x, params, n_head=H)
    out = jax.block_until_ready(out)

    ref = reference_block(x, params, n_head=H)
    assert out.shape == (B, T, D)
    max_err = float(jnp.max(jnp.abs(out - ref)))
    # bf16 matmul inputs + approx reciprocal -> looser tolerance than pure f32
    assert jnp.allclose(out, ref, rtol=1e-2, atol=1e-2), max_err

    print("KERNEL_OK")
</pallas_src>

<mosaic_0001>
module attributes {stable_mosaic.version = 11 : i64} {
  func.func @_ln_qkv_kernel(%arg0: i32, %arg1: i32, %arg2: memref<1x16x32xf32, #tpu.memory_space<vmem>>, %arg3: memref<1x32xf32, #tpu.memory_space<vmem>>, %arg4: memref<1x32xf32, #tpu.memory_space<vmem>>, %arg5: memref<32x32xbf16, #tpu.memory_space<vmem>>, %arg6: memref<1x32xf32, #tpu.memory_space<vmem>>, %arg7: memref<32x32xbf16, #tpu.memory_space<vmem>>, %arg8: memref<32x32xbf16, #tpu.memory_space<vmem>>, %arg9: memref<1x32xf32, #tpu.memory_space<vmem>>, %arg10: memref<1x4x16x8xbf16, #tpu.memory_space<vmem>>, %arg11: memref<1x4x16x8xbf16, #tpu.memory_space<vmem>>, %arg12: memref<1x4x16x8xbf16, #tpu.memory_space<vmem>>) attributes {dimension_semantics = [#tpu.dimension_semantics<parallel>, #tpu.dimension_semantics<parallel>], iteration_bounds = array<i64: 2, 2>, scalar_prefetch = 0 : i64, scratch_operands = 0 : i64, tpu.core_type = #tpu.core_type<tc>, window_params = [{transform_indices = @transform_0, window_bounds = array<i64: 1, 16, 32>}, {pipeline_mode = #tpu.pipeline_mode<synchronous>, transform_indices = @transform_1, window_bounds = array<i64: 1, 32>}, {pipeline_mode = #tpu.pipeline_mode<synchronous>, transform_indices = @transform_2, window_bounds = array<i64: 1, 32>}, {pipeline_mode = #tpu.pipeline_mode<synchronous>, transform_indices = @transform_3, window_bounds = array<i64: 32, 32>}, {pipeline_mode = #tpu.pipeline_mode<synchronous>, transform_indices = @transform_4, window_bounds = array<i64: 1, 32>}, {pipeline_mode = #tpu.pipeline_mode<synchronous>, transform_indices = @transform_5, window_bounds = array<i64: 32, 32>}, {pipeline_mode = #tpu.pipeline_mode<synchronous>, transform_indices = @transform_6, window_bounds = array<i64: 32, 32>}, {pipeline_mode = #tpu.pipeline_mode<synchronous>, transform_indices = @transform_7, window_bounds = array<i64: 1, 32>}, {transform_indices = @transform_8, window_bounds = array<i64: 1, 4, 16, 8>}, {transform_indices = @transform_9, window_bounds = array<i64: 1, 4, 16, 8>}, {transform_indices = @transform_10, window_bounds = array<i64: 1, 4, 16, 8>}]} {
    %c0 = arith.constant 0 : index
    %c0_0 = arith.constant 0 : index
    %c0_1 = arith.constant 0 : index
    %0 = vector.load %arg2[%c0, %c0_0, %c0_1] : memref<1x16x32xf32, #tpu.memory_space<vmem>>, vector<1x16x32xf32>
    %1 = vector.shape_cast %0 : vector<1x16x32xf32> to vector<16x32xf32>
    %c0_2 = arith.constant 0 : index
    %c0_3 = arith.constant 0 : index
    %2 = vector.load %arg3[%c0_2, %c0_3] : memref<1x32xf32, #tpu.memory_space<vmem>>, vector<1x32xf32>
    %3 = vector.shape_cast %2 : vector<1x32xf32> to vector<32xf32>
    %c0_4 = arith.constant 0 : index
    %c0_5 = arith.constant 0 : index
    %4 = vector.load %arg4[%c0_4, %c0_5] : memref<1x32xf32, #tpu.memory_space<vmem>>, vector<1x32xf32>
    %5 = vector.shape_cast %4 : vector<1x32xf32> to vector<32xf32>
    %cst = arith.constant dense<0.000000e+00> : vector<16xf32>
    %6 = vector.multi_reduction <add>, %1, %cst [1] : vector<16x32xf32> to vector<16xf32>
    %7 = vector.shape_cast %6 : vector<16xf32> to vector<16x1xf32>
    %cst_6 = arith.constant 3.200000e+01 : f32
    %8 = vector.broadcast %cst_6 : f32 to vector<16x1xf32>
    %9 = arith.divf %7, %8 : vector<16x1xf32>
    %10 = vector.broadcast %9 : vector<16x1xf32> to vector<16x32xf32>
    %11 = arith.subf %1, %10 : vector<16x32xf32>
    %12 = arith.mulf %11, %11 : vector<16x32xf32>
    %cst_7 = arith.constant dense<0.000000e+00> : vector<16xf32>
    %13 = vector.multi_reduction <add>, %12, %cst_7 [1] : vector<16x32xf32> to vector<16xf32>
    %14 = vector.shape_cast %13 : vector<16xf32> to vector<16x1xf32>
    %cst_8 = arith.constant 3.200000e+01 : f32
    %15 = vector.broadcast %cst_8 : f32 to vector<16x1xf32>
    %16 = arith.divf %14, %15 : vector<16x1xf32>
    %17 = vector.broadcast %9 : vector<16x1xf32> to vector<16x32xf32>
    %18 = arith.subf %1, %17 : vector<16x32xf32>
    %cst_9 = arith.constant 9.99999974E-6 : f32
    %19 = vector.broadcast %cst_9 : f32 to vector<16x1xf32>
    %20 = arith.addf %16, %19 : vector<16x1xf32>
    %21 = math.rsqrt %20 : vector<16x1xf32>
    %22 = vector.broadcast %21 : vector<16x1xf32> to vector<16x32xf32>
    %23 = arith.mulf %18, %22 : vector<16x32xf32>
    %24 = vector.shape_cast %3 : vector<32xf32> to vector<1x32xf32>
    %25 = vector.broadcast %24 : vector<1x32xf32> to vector<16x32xf32>
    %26 = arith.mulf %23, %25 : vector<16x32xf32>
    %27 = vector.shape_cast %5 : vector<32xf32> to vector<1x32xf32>
    %28 = vector.broadcast %27 : vector<1x32xf32> to vector<16x32xf32>
    %29 = arith.addf %26, %28 : vector<16x32xf32>
    %30 = arith.truncf %29 : vector<16x32xf32> to vector<16x32xbf16>
    %c0_10 = arith.constant 0 : index
    %c0_11 = arith.constant 0 : index
    %31 = vector.load %arg5[%c0_10, %c0_11] : memref<32x32xbf16, #tpu.memory_space<vmem>>, vector<32x32xbf16>
    %cst_12 = arith.constant dense<0.000000e+00> : vector<16x32xf32>
    %32 = tpu.matmul %30, %31, %cst_12 {dimension_numbers = #tpu.dot_dimension_numbers<[1], [0], [0], [1], [0, 0, 1, 1], [], []>} : vector<16x32xbf16>, vector<32x32xbf16>, vector<16x32xf32> -> vector<16x32xf32>
    %c0_13 = arith.constant 0 : index
    %c0_14 = arith.constant 0 : index
    %33 = vector.load %arg6[%c0_13, %c0_14] : memref<1x32xf32, #tpu.memory_space<vmem>>, vector<1x32xf32>
    %34 = vector.shape_cast %33 : vector<1x32xf32> to vector<32xf32>
    %35 = vector.shape_cast %34 : vector<32xf32> to vector<1x32xf32>
    %36 = vector.broadcast %35 : vector<1x32xf32> to vector<16x32xf32>
    %37 = arith.addf %32, %36 : vector<16x32xf32>
    %c0_15 = arith.constant 0 : index
    %c0_16 = arith.constant 0 : index
    %38 = vector.load %arg7[%c0_15, %c0_16] : memref<32x32xbf16, #tpu.memory_space<vmem>>, vector<32x32xbf16>
    %cst_17 = arith.constant dense<0.000000e+00> : vector<16x32xf32>
    %39 = tpu.matmul %30, %38, %cst_17 {dimension_numbers = #tpu.dot_dimension_numbers<[1], [0], [0], [1], [0, 0, 1, 1], [], []>} : vector<16x32xbf16>, vector<32x32xbf16>, vector<16x32xf32> -> vector<16x32xf32>
    %c0_18 = arith.constant 0 : index
    %c0_19 = arith.constant 0 : index
    %40 = vector.load %arg8[%c0_18, %c0_19] : memref<32x32xbf16, #tpu.memory_space<vmem>>, vector<32x32xbf16>
    %cst_20 = arith.constant dense<0.000000e+00> : vector<16x32xf32>
    %41 = tpu.matmul %30, %40, %cst_20 {dimension_numbers = #tpu.dot_dimension_numbers<[1], [0], [0], [1], [0, 0, 1, 1], [], []>} : vector<16x32xbf16>, vector<32x32xbf16>, vector<16x32xf32> -> vector<16x32xf32>
    %c0_21 = arith.constant 0 : index
    %c0_22 = arith.constant 0 : index
    %42 = vector.load %arg9[%c0_21, %c0_22] : memref<1x32xf32, #tpu.memory_space<vmem>>, vector<1x32xf32>
    %43 = vector.shape_cast %42 : vector<1x32xf32> to vector<32xf32>
    %44 = vector.shape_cast %43 : vector<32xf32> to vector<1x32xf32>
    %45 = vector.broadcast %44 : vector<1x32xf32> to vector<16x32xf32>
    %46 = arith.addf %41, %45 : vector<16x32xf32>
    %cst_23 = arith.constant 0.353553385 : f32
    %47 = vector.broadcast %cst_23 : f32 to vector<16x32xf32>
    %48 = arith.mulf %37, %47 : vector<16x32xf32>
    %49 = vector.shape_cast %48 : vector<16x32xf32> to vector<16x4x8xf32>
    %50 = tpu.transpose %49, [1, 0, 2] : vector<16x4x8xf32> -> vector<4x16x8xf32>
    %51 = arith.truncf %50 : vector<4x16x8xf32> to vector<4x16x8xbf16>
    %c0_24 = arith.constant 0 : index
    %c0_25 = arith.constant 0 : index
    %c0_26 = arith.constant 0 : index
    %c0_27 = arith.constant 0 : index
    %52 = vector.load %arg10[%c0_24, %c0_25, %c0_26, %c0_27] : memref<1x4x16x8xbf16, #tpu.memory_space<vmem>>, vector<1x4x16x8xbf16>
    %53 = vector.shape_cast %52 : vector<1x4x16x8xbf16> to vector<4x16x8xbf16>
    %54 = vector.shape_cast %51 : vector<4x16x8xbf16> to vector<1x4x16x8xbf16>
    tpu.vector_store %arg10[%c0_24, %c0_25, %c0_26, %c0_27], %54 {strides = array<i32>} : memref<1x4x16x8xbf16, #tpu.memory_space<vmem>>, vector<1x4x16x8xbf16>,
    %55 = vector.shape_cast %39 : vector<16x32xf32> to vector<16x4x8xf32>
    %56 = tpu.transpose %55, [1, 0, 2] : vector<16x4x8xf32> -> vector<4x16x8xf32>
    %57 = arith.truncf %56 : vector<4x16x8xf32> to vector<4x16x8xbf16>
    %c0_28 = arith.constant 0 : index
    %c0_29 = arith.constant 0 : index
    %c0_30 = arith.constant 0 : index
    %c0_31 = arith.constant 0 : index
    %58 = vector.load %arg11[%c0_28, %c0_29, %c0_30, %c0_31] : memref<1x4x16x8xbf16, #tpu.memory_space<vmem>>, vector<1x4x16x8xbf16>
    %59 = vector.shape_cast %58 : vector<1x4x16x8xbf16> to vector<4x16x8xbf16>
    %60 = vector.shape_cast %57 : vector<4x16x8xbf16> to vector<1x4x16x8xbf16>
    tpu.vector_store %arg11[%c0_28, %c0_29, %c0_30, %c0_31], %60 {strides = array<i32>} : memref<1x4x16x8xbf16, #tpu.memory_space<vmem>>, vector<1x4x16x8xbf16>,
    %61 = vector.shape_cast %46 : vector<16x32xf32> to vector<16x4x8xf32>
    %62 = tpu.transpose %61, [1, 0, 2] : vector<16x4x8xf32> -> vector<4x16x8xf32>
    %63 = arith.truncf %62 : vector<4x16x8xf32> to vector<4x16x8xbf16>
    %c0_32 = arith.constant 0 : index
    %c0_33 = arith.constant 0 : index
    %c0_34 = arith.constant 0 : index
    %c0_35 = arith.constant 0 : index
    %64 = vector.load %arg12[%c0_32, %c0_33, %c0_34, %c0_35] : memref<1x4x16x8xbf16, #tpu.memory_space<vmem>>, vector<1x4x16x8xbf16>
    %65 = vector.shape_cast %64 : vector<1x4x16x8xbf16> to vector<4x16x8xbf16>
    %66 = vector.shape_cast %63 : vector<4x16x8xbf16> to vector<1x4x16x8xbf16>
    tpu.vector_store %arg12[%c0_32, %c0_33, %c0_34, %c0_35], %66 {strides = array<i32>} : memref<1x4x16x8xbf16, #tpu.memory_space<vmem>>, vector<1x4x16x8xbf16>,
    return
  }
  func.func @transform_0(%arg0: i32, %arg1: i32) -> (i32, i32, i32) {
    %c0_i32 = arith.constant 0 : i32
    %c0_i32_0 = arith.constant 0 : i32
    return %arg0, %arg1, %c0_i32 : i32, i32, i32
  }
  func.func @transform_1(%arg0: i32, %arg1: i32) -> (i32, i32) {
    %c0_i32 = arith.constant 0 : i32
    %c0_i32_0 = arith.constant 0 : i32
    %c0_i32_1 = arith.constant 0 : i32
    return %c0_i32, %c0_i32_0 : i32, i32
  }
  func.func @transform_2(%arg0: i32, %arg1: i32) -> (i32, i32) {
    %c0_i32 = arith.constant 0 : i32
    %c0_i32_0 = arith.constant 0 : i32
    %c0_i32_1 = arith.constant 0 : i32
    return %c0_i32, %c0_i32_0 : i32, i32
  }
  func.func @transform_3(%arg0: i32, %arg1: i32) -> (i32, i32) {
    %c0_i32 = arith.constant 0 : i32
    %c0_i32_0 = arith.constant 0 : i32
    %c0_i32_1 = arith.constant 0 : i32
    return %c0_i32, %c0_i32_0 : i32, i32
  }
  func.func @transform_4(%arg0: i32, %arg1: i32) -> (i32, i32) {
    %c0_i32 = arith.constant 0 : i32
    %c0_i32_0 = arith.constant 0 : i32
    %c0_i32_1 = arith.constant 0 : i32
    return %c0_i32, %c0_i32_0 : i32, i32
  }
  func.func @transform_5(%arg0: i32, %arg1: i32) -> (i32, i32) {
    %c0_i32 = arith.constant 0 : i32
    %c0_i32_0 = arith.constant 0 : i32
    %c0_i32_1 = arith.constant 0 : i32
    return %c0_i32, %c0_i32_0 : i32, i32
  }
  func.func @transform_6(%arg0: i32, %arg1: i32) -> (i32, i32) {
    %c0_i32 = arith.constant 0 : i32
    %c0_i32_0 = arith.constant 0 : i32
    %c0_i32_1 = arith.constant 0 : i32
    return %c0_i32, %c0_i32_0 : i32, i32
  }
  func.func @transform_7(%arg0: i32, %arg1: i32) -> (i32, i32) {
    %c0_i32 = arith.constant 0 : i32
    %c0_i32_0 = arith.constant 0 : i32
    %c0_i32_1 = arith.constant 0 : i32
    return %c0_i32, %c0_i32_0 : i32, i32
  }
  func.func @transform_8(%arg0: i32, %arg1: i32) -> (i32, i32, i32, i32) {
    %c0_i32 = arith.constant 0 : i32
    %c0_i32_0 = arith.constant 0 : i32
    %c0_i32_1 = arith.constant 0 : i32
    return %arg0, %c0_i32, %arg1, %c0_i32_0 : i32, i32, i32, i32
  }
  func.func @transform_9(%arg0: i32, %arg1: i32) -> (i32, i32, i32, i32) {
    %c0_i32 = arith.constant 0 : i32
    %c0_i32_0 = arith.constant 0 : i32
    %c0_i32_1 = arith.constant 0 : i32
    return %arg0, %c0_i32, %arg1, %c0_i32_0 : i32, i32, i32, i32
  }
  func.func @transform_10(%arg0: i32, %arg1: i32) -> (i32, i32, i32, i32) {
    %c0_i32 = arith.constant 0 : i32
    %c0_i32_0 = arith.constant 0 : i32
    %c0_i32_1 = arith.constant 0 : i32
    return %arg0, %c0_i32, %arg1, %c0_i32_0 : i32, i32, i32, i32
  }
}

</mosaic_0001>

<llo_original>
// kernel: tpu_custom_call.1
$region0: #{tpu_custom_call.1}
  #allocation0 [shape = 'u32[]', space=smem, size = 0x4, offset = 0x4, fixed_abs, tag = 'smem constant byte address 0x4 - core index']
  #allocation1 [shape = 'u32[144,128]{1,0:T(1,128)}', space=vmem, size = 0x12000, scoped, tag = 'internal scratch']
  #allocation20 [shape = 's32[]', space=sflag, size = 0x4, offset = 0, fixed_abs, tag = 'sflag constant byte address 0x0 - dummy sync flag']
  #allocation22 [shape = 's32[]', space=sflag, size = 0x4, offset = 0, fixed_abs, tag = 'sflag constant byte address 0x0 - dummy sync flag']
  #allocation24 [shape = 's32[]', space=sflag, size = 0x4, offset = 0, fixed_abs, tag = 'sflag constant byte address 0x0 - dummy sync flag']
  %s0 = inlined_call_operand.hbm [shape: f32[2,32,32], index: 0, kind: input, shape index: {}]
  %s1 = inlined_call_operand.hbm [shape: f32[1,32], index: 1, kind: input, shape index: {}]
  %s2 = inlined_call_operand.hbm [shape: f32[1,32], index: 2, kind: input, shape index: {}]
  %s3 = inlined_call_operand.hbm [shape: bf16[32,32], index: 3, kind: input, shape index: {}]
  %s4 = inlined_call_operand.hbm [shape: f32[1,32], index: 4, kind: input, shape index: {}]
  %s5 = inlined_call_operand.hbm [shape: bf16[32,32], index: 5, kind: input, shape index: {}]
  %s6 = inlined_call_operand.hbm [shape: bf16[32,32], index: 6, kind: input, shape index: {}]
  %s7 = inlined_call_operand.hbm [shape: f32[1,32], index: 7, kind: input, shape index: {}]
  %s8 = inlined_call_operand.hbm [shape: bf16[2,4,32,8], index: 8, kind: output, shape index: {0}]
  %s9 = inlined_call_operand.hbm [shape: bf16[2,4,32,8], index: 9, kind: output, shape index: {1}]
  %s10 = inlined_call_operand.hbm [shape: bf16[2,4,32,8], index: 10, kind: output, shape index: {2}]
  %11 = xla_tuple %s8, %s9, %s10
  %s12 = sld [smem:[#allocation0]]
  $region113: #{tpu_custom_call.1} parent=0
    _
  %s14 = ssub.s32 1, %s12
  %s15 = scalar_select 0, %s14, %s12
  $region1: #{tpu_custom_call.1} parent=0
    #allocation2 [shape = 'u8[16384]{0}', space=vmem, size = 0x4000, scoped, tag = 'input window, operand 0']
    #allocation3 [shape = 's32[2]{0}', space=sflag, size = 0x8, scoped, tag = 'scoped memory for tpu_custom_call.1']
    #allocation4 [shape = 's32[2]{0}', space=sflag, size = 0x8, scoped, tag = 'scoped memory for tpu_custom_call.1']
    #allocation5 [shape = 'u8[512]{0}', space=vmem, size = 0x400, scoped, tag = 'input window, operand 1, single buffered']
    #allocation6 [shape = 's32[1]{0}', space=sflag, size = 0x4, scoped, tag = 'scoped memory for tpu_custom_call.1']
    #allocation7 [shape = 'u8[512]{0}', space=vmem, size = 0x400, scoped, tag = 'input window, operand 2, single buffered']
    #allocation8 [shape = 'u8[8192]{0}', space=vmem, size = 0x2000, scoped, tag = 'input window, operand 3, single buffered']
    #allocation9 [shape = 's32[1]{0}', space=sflag, size = 0x4, scoped, tag = 'scoped memory for tpu_custom_call.1']
    #allocation10 [shape = 'u8[512]{0}', space=vmem, size = 0x400, scoped, tag = 'input window, operand 4, single buffered']
    #allocation11 [shape = 'u8[8192]{0}', space=vmem, size = 0x2000, scoped, tag = 'input window, operand 5, single buffered']
    #allocation12 [shape = 's32[1]{0}', space=sflag, size = 0x4, scoped, tag = 'scoped memory for tpu_custom_call.1']
    #allocation13 [shape = 'u8[8192]{0}', space=vmem, size = 0x2000, scoped, tag = 'input window, operand 6, single buffered']
    #allocation14 [shape = 'u8[512]{0}', space=vmem, size = 0x400, scoped, tag = 'input window, operand 7, single buffered']
    #allocation15 [shape = 's32[1]{0}', space=sflag, size = 0x4, scoped, tag = 'scoped memory for tpu_custom_call.1']
    #allocation16 [shape = 'u8[32768]{0}', space=vmem, size = 0x8000, scoped, tag = 'output window, operand 0']
    #allocation17 [shape = 'u8[32768]{0}', space=vmem, size = 0x8000, scoped, tag = 'output window, operand 1']
    #allocation18 [shape = 's32[2]{0}', space=sflag, size = 0x8, scoped, tag = 'scoped memory for tpu_custom_call.1']
    #allocation19 [shape = 'u8[32768]{0}', space=vmem, size = 0x8000, scoped, tag = 'output window, operand 2']
    %16 = vsyncpa [#allocation3], 0
    %s17 = scalar_lea.sflag [#allocation3], 1
    %18 = vsyncpa %s17, 0
    %19 = vsyncpa [#allocation6], 0
    %20 = vsyncpa [#allocation9], 0
    %21 = vsyncpa [#allocation12], 0
    %22 = vsyncpa [#allocation15], 0
    %23 = vsyncpa [#allocation4], 0
    %s24 = scalar_lea.sflag [#allocation4], 1
    %25 = vsyncpa %s24, 0
    %26 = vsyncpa [#allocation18], 0
    %s27 = scalar_lea.sflag [#allocation18], 1
    %28 = vsyncpa %s27, 0
    loop: start=0, step=1, limit=6
    $region2: #{tpu_custom_call.1} parent=1 // loop_pre_header
      _
    $region3: #{tpu_custom_call.1} parent=1 // loop_header
      %s30 = sphi 0, %s34
      %p31 = scmp.ge.s32.totalorder %s30, 6
      %s37 = sphi 0, %s49
      %s38 = sphi 0, %s45
      %s39 = sphi 0, %s37
      %s40 = sphi 0, %s38
      %s41 = sphi 0, %s39
      %s42 = sphi 0, %s40
      %s54 = sphi 0, %s56
      %s57 = sphi 0, %s54
      %s58 = sphi 0, %s57
      %s74 = sphi 0, %s58
      %s78 = sphi 0, %s78
      %s80 = sphi 0, %s78
      %s81 = sphi 0, %s80
      %s95 = sphi 0, %s81
      %s99 = sphi 0, %s99
      %s101 = sphi 0, %s99
      %s102 = sphi 0, %s101
      %s116 = sphi 0, %s102
      %s120 = sphi 0, %s120
      %s122 = sphi 0, %s120
      %s123 = sphi 0, %s122
      %s137 = sphi 0, %s123
      %s141 = sphi 0, %s141
      %s143 = sphi 0, %s141
      %s144 = sphi 0, %s143
      %s158 = sphi 0, %s144
      %s162 = sphi 0, %s162
      %s164 = sphi 0, %s162
      %s165 = sphi 0, %s164
      %s179 = sphi 0, %s165
      %s183 = sphi 0, %s183
      %s185 = sphi 0, %s183
      %s186 = sphi 0, %s185
      %s200 = sphi 0, %s186
      %s204 = sphi 0, %s204
      %s206 = sphi 0, %s204
      %s207 = sphi 0, %s206
      %s221 = sphi 0, %s207
      %s229 = sphi 0, %s231
      %s232 = sphi 0, %s229
      %s233 = sphi 0, %s232
      %s249 = sphi 0, %s233
      %s257 = sphi 0, %s259
      %s260 = sphi 0, %s257
      %s261 = sphi 0, %s260
      %s277 = sphi 0, %s261
      %s285 = sphi 0, %s287
      %s288 = sphi 0, %s285
      %s289 = sphi 0, %s288
      %s305 = sphi 0, %s289
    $region4: #{tpu_custom_call.1} parent=1 // loop_header_branch
      %33 = sbr.rel (%p31) target = $region8
    $region5: #{tpu_custom_call.1} parent=1 // loop_body
      %s35 = ssub.s32 %s30, 1
      %s36 = ssub.s32 %s30, 2
      %s43 = sadd.s32 1, %s38
      %p44 = scmp.ge.s32.totalorder %s43, 2
      %s45 = scalar_select %p44, 0, %s43
      %s46 = sadd.s32 1, %s37
      %s47 = scalar_select %p44, %s46, %s37
      %p48 = scmp.ge.s32.totalorder %s47, 2
      %s49 = scalar_select %p48, 0, %s47
      %s50 = ssub.s32 %s37, %s49
      %s51 = ssub.s32 %s38, %s45
      %s52 = sor.u32 %s50, %s51
      %p53 = scmp.eq.s32.totalorder %s52, 0
      %s55 = sadd.s32 %s54, 1
      %s56 = scalar_select %p53, %s54, %s55
      %p59 = pneg %p53
      %p60 = scmp.eq.s32.totalorder %s30, 3
      %p61 = por %p59, %p60
      %p62 = scmp.ne.s32.totalorder %s54, %s57
      %p63 = scmp.eq.s32.totalorder %s30, 0
      %p64 = por %p62, %p63
      %p65 = scmp.ne.s32.totalorder %s54, %s57
      %p66 = scmp.eq.s32.totalorder %s35, 3
      %p67 = por %p65, %p66
      %p68 = scmp.ne.s32.totalorder %s57, %s58
      %p69 = scmp.eq.s32.totalorder %s35, 0
      %p70 = por %p68, %p69
      %p71 = scmp.ne.s32.totalorder %s57, %s58
      %p72 = scmp.eq.s32.totalorder %s36, 3
      %p73 = por %p71, %p72
      %p75 = scmp.ne.s32.totalorder %s58, %s74
      %p76 = scmp.eq.s32.totalorder %s36, 0
      %p77 = por %p75, %p76
      %s79 = sadd.s32 %s78, 1
      %p82 = scmp.eq.s32.totalorder %s30, 3
      %p83 = scmp.ne.s32.totalorder %s78, %s80
      %p84 = scmp.eq.s32.totalorder %s30, 0
      %p85 = por %p83, %p84
      %p86 = scmp.ne.s32.totalorder %s78, %s80
      %p87 = scmp.eq.s32.totalorder %s35, 3
      %p88 = por %p86, %p87
      %p89 = scmp.ne.s32.totalorder %s80, %s81
      %p90 = scmp.eq.s32.totalorder %s35, 0
      %p91 = por %p89, %p90
      %p92 = scmp.ne.s32.totalorder %s80, %s81
      %p93 = scmp.eq.s32.totalorder %s36, 3
      %p94 = por %p92, %p93
      %p96 = scmp.ne.s32.totalorder %s81, %s95
      %p97 = scmp.eq.s32.totalorder %s36, 0
      %p98 = por %p96, %p97
      %s100 = sadd.s32 %s99, 1
      %p103 = scmp.eq.s32.totalorder %s30, 3
      %p104 = scmp.ne.s32.totalorder %s99, %s101
      %p105 = scmp.eq.s32.totalorder %s30, 0
      %p106 = por %p104, %p105
      %p107 = scmp.ne.s32.totalorder %s99, %s101
      %p108 = scmp.eq.s32.totalorder %s35, 3
      %p109 = por %p107, %p108
      %p110 = scmp.ne.s32.totalorder %s101, %s102
      %p111 = scmp.eq.s32.totalorder %s35, 0
      %p112 = por %p110, %p111
      %p113 = scmp.ne.s32.totalorder %s101, %s102
      %p114 = scmp.eq.s32.totalorder %s36, 3
      %p115 = por %p113, %p114
      %p117 = scmp.ne.s32.totalorder %s102, %s116
      %p118 = scmp.eq.s32.totalorder %s36, 0
      %p119 = por %p117, %p118
      %s121 = sadd.s32 %s120, 1
      %p124 = scmp.eq.s32.totalorder %s30, 3
      %p125 = scmp.ne.s32.totalorder %s120, %s122
      %p126 = scmp.eq.s32.totalorder %s30, 0
      %p127 = por %p125, %p126
      %p128 = scmp.ne.s32.totalorder %s120, %s122
      %p129 = scmp.eq.s32.totalorder %s35, 3
      %p130 = por %p128, %p129
      %p131 = scmp.ne.s32.totalorder %s122, %s123
      %p132 = scmp.eq.s32.totalorder %s35, 0
      %p133 = por %p131, %p132
      %p134 = scmp.ne.s32.totalorder %s122, %s123
      %p135 = scmp.eq.s32.totalorder %s36, 3
      %p136 = por %p134, %p135
      %p138 = scmp.ne.s32.totalorder %s123, %s137
      %p139 = scmp.eq.s32.totalorder %s36, 0
      %p140 = por %p138, %p139
      %s142 = sadd.s32 %s141, 1
      %p145 = scmp.eq.s32.totalorder %s30, 3
      %p146 = scmp.ne.s32.totalorder %s141, %s143
      %p147 = scmp.eq.s32.totalorder %s30, 0
      %p148 = por %p146, %p147
      %p149 = scmp.ne.s32.totalorder %s141, %s143
      %p150 = scmp.eq.s32.totalorder %s35, 3
      %p151 = por %p149, %p150
      %p152 = scmp.ne.s32.totalorder %s143, %s144
      %p153 = scmp.eq.s32.totalorder %s35, 0
      %p154 = por %p152, %p153
      %p155 = scmp.ne.s32.totalorder %s143, %s144
      %p156 = scmp.eq.s32.totalorder %s36, 3
      %p157 = por %p155, %p156
      %p159 = scmp.ne.s32.totalorder %s144, %s158
      %p160 = scmp.eq.s32.totalorder %s36, 0
      %p161 = por %p159, %p160
      %s163 = sadd.s32 %s162, 1
      %p166 = scmp.eq.s32.totalorder %s30, 3
      %p167 = scmp.ne.s32.totalorder %s162, %s164
      %p168 = scmp.eq.s32.totalorder %s30, 0
      %p169 = por %p167, %p168
      %p170 = scmp.ne.s32.totalorder %s162, %s164
      %p171 = scmp.eq.s32.totalorder %s35, 3
      %p172 = por %p170, %p171
      %p173 = scmp.ne.s32.totalorder %s164, %s165
      %p174 = scmp.eq.s32.totalorder %s35, 0
      %p175 = por %p173, %p174
      %p176 = scmp.ne.s32.totalorder %s164, %s165
      %p177 = scmp.eq.s32.totalorder %s36, 3
      %p178 = por %p176, %p177
      %p180 = scmp.ne.s32.totalorder %s165, %s179
      %p181 = scmp.eq.s32.totalorder %s36, 0
      %p182 = por %p180, %p181
      %s184 = sadd.s32 %s183, 1
      %p187 = scmp.eq.s32.totalorder %s30, 3
      %p188 = scmp.ne.s32.totalorder %s183, %s185
      %p189 = scmp.eq.s32.totalorder %s30, 0
      %p190 = por %p188, %p189
      %p191 = scmp.ne.s32.totalorder %s183, %s185
      %p192 = scmp.eq.s32.totalorder %s35, 3
      %p193 = por %p191, %p192
      %p194 = scmp.ne.s32.totalorder %s185, %s186
      %p195 = scmp.eq.s32.totalorder %s35, 0
      %p196 = por %p194, %p195
      %p197 = scmp.ne.s32.totalorder %s185, %s186
      %p198 = scmp.eq.s32.totalorder %s36, 3
      %p199 = por %p197, %p198
      %p201 = scmp.ne.s32.totalorder %s186, %s200
      %p202 = scmp.eq.s32.totalorder %s36, 0
      %p203 = por %p201, %p202
      %s205 = sadd.s32 %s204, 1
      %p208 = scmp.eq.s32.totalorder %s30, 3
      %p209 = scmp.ne.s32.totalorder %s204, %s206
      %p210 = scmp.eq.s32.totalorder %s30, 0
      %p211 = por %p209, %p210
      %p212 = scmp.ne.s32.totalorder %s204, %s206
      %p213 = scmp.eq.s32.totalorder %s35, 3
      %p214 = por %p212, %p213
      %p215 = scmp.ne.s32.totalorder %s206, %s207
      %p216 = scmp.eq.s32.totalorder %s35, 0
      %p217 = por %p215, %p216
      %p218 = scmp.ne.s32.totalorder %s206, %s207
      %p219 = scmp.eq.s32.totalorder %s36, 3
      %p220 = por %p218, %p219
      %p222 = scmp.ne.s32.totalorder %s207, %s221
      %p223 = scmp.eq.s32.totalorder %s36, 0
      %p224 = por %p222, %p223
      %s225 = ssub.s32 %s37, %s49
      %s226 = ssub.s32 %s38, %s45
      %s227 = sor.u32 %s225, %s226
      %p228 = scmp.eq.s32.totalorder %s227, 0
      %s230 = sadd.s32 %s229, 1
      %s231 = scalar_select %p228, %s229, %s230
      %p234 = pneg %p228
      %p235 = scmp.eq.s32.totalorder %s30, 3
      %p236 = por %p234, %p235
      %p237 = scmp.ne.s32.totalorder %s229, %s232
      %p238 = scmp.eq.s32.totalorder %s30, 0
      %p239 = por %p237, %p238
      %p240 = scmp.ne.s32.totalorder %s229, %s232
      %p241 = scmp.eq.s32.totalorder %s35, 3
      %p242 = por %p240, %p241
      %p243 = scmp.ne.s32.totalorder %s232, %s233
      %p244 = scmp.eq.s32.totalorder %s35, 0
      %p245 = por %p243, %p244
      %p246 = scmp.ne.s32.totalorder %s232, %s233
      %p247 = scmp.eq.s32.totalorder %s36, 3
      %p248 = por %p246, %p247
      %p250 = scmp.ne.s32.totalorder %s233, %s249
      %p251 = scmp.eq.s32.totalorder %s36, 0
      %p252 = por %p250, %p251
      %s253 = ssub.s32 %s37, %s49
      %s254 = ssub.s32 %s38, %s45
      %s255 = sor.u32 %s253, %s254
      %p256 = scmp.eq.s32.totalorder %s255, 0
      %s258 = sadd.s32 %s257, 1
      %s259 = scalar_select %p256, %s257, %s258
      %p262 = pneg %p256
      %p263 = scmp.eq.s32.totalorder %s30, 3
      %p264 = por %p262, %p263
      %p265 = scmp.ne.s32.totalorder %s257, %s260
      %p266 = scmp.eq.s32.totalorder %s30, 0
      %p267 = por %p265, %p266
      %p268 = scmp.ne.s32.totalorder %s257, %s260
      %p269 = scmp.eq.s32.totalorder %s35, 3
      %p270 = por %p268, %p269
      %p271 = scmp.ne.s32.totalorder %s260, %s261
      %p272 = scmp.eq.s32.totalorder %s35, 0
      %p273 = por %p271, %p272
      %p274 = scmp.ne.s32.totalorder %s260, %s261
      %p275 = scmp.eq.s32.totalorder %s36, 3
      %p276 = por %p274, %p275
      %p278 = scmp.ne.s32.totalorder %s261, %s277
      %p279 = scmp.eq.s32.totalorder %s36, 0
      %p280 = por %p278, %p279
      %s281 = ssub.s32 %s37, %s49
      %s282 = ssub.s32 %s38, %s45
      %s283 = sor.u32 %s281, %s282
      %p284 = scmp.eq.s32.totalorder %s283, 0
      %s286 = sadd.s32 %s285, 1
      %s287 = scalar_select %p284, %s285, %s286
      %p290 = pneg %p284
      %p291 = scmp.eq.s32.totalorder %s30, 3
      %p292 = por %p290, %p291
      %p293 = scmp.ne.s32.totalorder %s285, %s288
      %p294 = scmp.eq.s32.totalorder %s30, 0
      %p295 = por %p293, %p294
      %p296 = scmp.ne.s32.totalorder %s285, %s288
      %p297 = scmp.eq.s32.totalorder %s35, 3
      %p298 = por %p296, %p297
      %p299 = scmp.ne.s32.totalorder %s288, %s289
      %p300 = scmp.eq.s32.totalorder %s35, 0
      %p301 = por %p299, %p300
      %p302 = scmp.ne.s32.totalorder %s288, %s289
      %p303 = scmp.eq.s32.totalorder %s36, 3
      %p304 = por %p302, %p303
      %p306 = scmp.ne.s32.totalorder %s289, %s305
      %p307 = scmp.eq.s32.totalorder %s36, 0
      %p308 = por %p306, %p307
      %p309 = scmp.le.s32.totalorder 1, %s30
      %p310 = scmp.lt.s32.totalorder %s30, 5
      %p311 = pnand %p309, %p310
      %p312 = pneg %p311
      // Predicated region
      $region9: #{tpu_custom_call.1} parent=5 // pred_check
        _
      $region10: #{tpu_custom_call.1} parent=5 // pred_check_branch
        %314 = sbr.rel (%p311) target = $region12
      $region11: #{tpu_custom_call.1} parent=5 // pred_region
        %s315 = ssub.s32 %s30, 1
        // Predicated region
        $region13: #{tpu_custom_call.1} parent=11 // pred_check
          %p316 = pneg %p91
        $region14: #{tpu_custom_call.1} parent=11 // pred_check_branch
          %318 = sbr.rel (%p316) target = $region16
        $region15: #{tpu_custom_call.1} parent=11 // pred_region
          %s320 = ssub.s32 16, 16
          %321 = vsyncadd [#allocation6], %s320
          %s323 = sshll.u32 [#allocation5], 4
          %s324 = int_to_ptr.vmem [resolvable:$true] %s323
          %326 = dma.hbm_to_vmem [thread:$0]  %s1, 16, %s324, [#allocation6]
        $region16: #{tpu_custom_call.1} parent=11 // pred_fallthru
          _
        // Predicated region
        $region17: #{tpu_custom_call.1} parent=11 // pred_check
          %p327 = pneg %p112
        $region18: #{tpu_custom_call.1} parent=11 // pred_check_branch
          %329 = sbr.rel (%p327) target = $region20
        $region19: #{tpu_custom_call.1} parent=11 // pred_region
          %s331 = ssub.s32 16, 16
          %332 = vsyncadd [#allocation6], %s331
          %s334 = sshll.u32 [#allocation7], 4
          %s335 = int_to_ptr.vmem [resolvable:$true] %s334
          %337 = dma.hbm_to_vmem [thread:$0]  %s2, 16, %s335, [#allocation6]
        $region20: #{tpu_custom_call.1} parent=11 // pred_fallthru
          _
        // Predicated region
        $region21: #{tpu_custom_call.1} parent=11 // pred_check
          %p338 = pneg %p133
        $region22: #{tpu_custom_call.1} parent=11 // pred_check_branch
          %340 = sbr.rel (%p338) target = $region24
        $region23: #{tpu_custom_call.1} parent=11 // pred_region
          %s342 = ssub.s32 256, 256
          %343 = vsyncadd [#allocation9], %s342
          %s344 = sshll.u32 [#allocation8], 4
          %s345 = int_to_ptr.vmem [resolvable:$true] %s344
          %350 = dma.hbm_to_vmem [thread:$0]  %s3, 256, %s345, [#allocation9], 64, 64, 4
        $region24: #{tpu_custom_call.1} parent=11 // pred_fallthru
          _
        // Predicated region
        $region25: #{tpu_custom_call.1} parent=11 // pred_check
          %p351 = pneg %p154
        $region26: #{tpu_custom_call.1} parent=11 // pred_check_branch
          %353 = sbr.rel (%p351) target = $region28
        $region27: #{tpu_custom_call.1} parent=11 // pred_region
          %s355 = ssub.s32 16, 16
          %356 = vsyncadd [#allocation9], %s355
          %s358 = sshll.u32 [#allocation10], 4
          %s359 = int_to_ptr.vmem [resolvable:$true] %s358
          %361 = dma.hbm_to_vmem [thread:$0]  %s4, 16, %s359, [#allocation9]
        $region28: #{tpu_custom_call.1} parent=11 // pred_fallthru
          _
        // Predicated region
        $region29: #{tpu_custom_call.1} parent=11 // pred_check
          %p362 = pneg %p175
        $region30: #{tpu_custom_call.1} parent=11 // pred_check_branch
          %364 = sbr.rel (%p362) target = $region32
        $region31: #{tpu_custom_call.1} parent=11 // pred_region
          %s366 = ssub.s32 256, 256
          %367 = vsyncadd [#allocation12], %s366
          %s368 = sshll.u32 [#allocation11], 4
          %s369 = int_to_ptr.vmem [resolvable:$true] %s368
          %374 = dma.hbm_to_vmem [thread:$0]  %s5, 256, %s369, [#allocation12], 64, 64, 4
        $region32: #{tpu_custom_call.1} parent=11 // pred_fallthru
          _
        // Predicated region
        $region33: #{tpu_custom_call.1} parent=11 // pred_check
          %p375 = pneg %p196
        $region34: #{tpu_custom_call.1} parent=11 // pred_check_branch
          %377 = sbr.rel (%p375) target = $region36
        $region35: #{tpu_custom_call.1} parent=11 // pred_region
          %s379 = ssub.s32 256, 256
          %380 = vsyncadd [#allocation12], %s379
          %s381 = sshll.u32 [#allocation13], 4
          %s382 = int_to_ptr.vmem [resolvable:$true] %s381
          %387 = dma.hbm_to_vmem [thread:$0]  %s6, 256, %s382, [#allocation12], 64, 64, 4
        $region36: #{tpu_custom_call.1} parent=11 // pred_fallthru
          _
        // Predicated region
        $region37: #{tpu_custom_call.1} parent=11 // pred_check
          %p388 = pneg %p217
        $region38: #{tpu_custom_call.1} parent=11 // pred_check_branch
          %390 = sbr.rel (%p388) target = $region40
        $region39: #{tpu_custom_call.1} parent=11 // pred_region
          %s392 = ssub.s32 16, 16
          %393 = vsyncadd [#allocation15], %s392
          %s395 = sshll.u32 [#allocation14], 4
          %s396 = int_to_ptr.vmem [resolvable:$true] %s395
          %398 = dma.hbm_to_vmem [thread:$0]  %s7, 16, %s396, [#allocation15]
        $region40: #{tpu_custom_call.1} parent=11 // pred_fallthru
          _
      $region12: #{tpu_custom_call.1} parent=5 // pred_fallthru
        _
      %p399 = scmp.lt.s32.totalorder %s30, 4
      // Predicated region
      $region41: #{tpu_custom_call.1} parent=5 // pred_check
        %p400 = pneg %p399
      $region42: #{tpu_custom_call.1} parent=5 // pred_check_branch
        %402 = sbr.rel (%p400) target = $region44
      $region43: #{tpu_custom_call.1} parent=5 // pred_region
        // Predicated region
        $region45: #{tpu_custom_call.1} parent=43 // pred_check
          %p403 = pneg %p64
        $region46: #{tpu_custom_call.1} parent=43 // pred_check_branch
          %405 = sbr.rel (%p403) target = $region48
        $region47: #{tpu_custom_call.1} parent=43 // pred_region
          %s406 = sand.u32 %s54, 1
          %s407 = scalar_lea.sflag [#allocation3], %s406
          %s408 = sand.u32 %s54, 1
          %s409 = smul.addr %s408, 16
          %s410 = scalar_lea.vmem [#allocation2], %s409
          %s411 = smul.u32 2, %s38
          %s413 = ssub.s32 256, 256
          %414 = vsyncadd %s407, %s413
          %s415 = smul.addr %s37, 4
          %s416 = sadd.s32 %s411, %s415
          %s417 = smul.addr %s416, 128
          %s418 = scalar_lea.hbm %s0, %s417
          %s419 = sshll.u32 %s410, 4
          %s420 = int_to_ptr.vmem [resolvable:$true] %s419
          %425 = dma.hbm_to_vmem [thread:$0]  %s418, 256, %s420, %s407, 128, 128, 8
        $region48: #{tpu_custom_call.1} parent=43 // pred_fallthru
          _
      $region44: #{tpu_custom_call.1} parent=5 // pred_fallthru
        _
      %p426 = scmp.le.s32.totalorder 1, %s30
      %p427 = scmp.lt.s32.totalorder %s30, 5
      %p428 = pnand %p426, %p427
      %p429 = pneg %p428
      // Predicated region
      $region49: #{tpu_custom_call.1} parent=5 // pred_check
        _
      $region50: #{tpu_custom_call.1} parent=5 // pred_check_branch
        %431 = sbr.rel (%p428) target = $region52
      $region51: #{tpu_custom_call.1} parent=5 // pred_region
        %s432 = ssub.s32 %s30, 1
        %s433 = sand.u32 %s57, 1
        %s434 = scalar_lea.sflag [#allocation3], %s433
        %s435 = sand.u32 %s57, 1
        %s436 = smul.addr %s435, 16
        %s437 = scalar_lea.vmem [#allocation2], %s436
        // Predicated region
        $region53: #{tpu_custom_call.1} parent=51 // pred_check
          %p438 = pneg %p70
        $region54: #{tpu_custom_call.1} parent=51 // pred_check_branch
          %440 = sbr.rel (%p438) target = $region56
        $region55: #{tpu_custom_call.1} parent=51 // pred_region
          %441 = dma.done %s434, 256
        $region56: #{tpu_custom_call.1} parent=51 // pred_fallthru
          _
        // Predicated region
        $region57: #{tpu_custom_call.1} parent=51 // pred_check
          %p442 = pneg %p91
        $region58: #{tpu_custom_call.1} parent=51 // pred_check_branch
          %444 = sbr.rel (%p442) target = $region60
        $region59: #{tpu_custom_call.1} parent=51 // pred_region
          %445 = dma.done [#allocation6], 16
        $region60: #{tpu_custom_call.1} parent=51 // pred_fallthru
          _
        // Predicated region
        $region61: #{tpu_custom_call.1} parent=51 // pred_check
          %p446 = pneg %p112
        $region62: #{tpu_custom_call.1} parent=51 // pred_check_branch
          %448 = sbr.rel (%p446) target = $region64
        $region63: #{tpu_custom_call.1} parent=51 // pred_region
          %449 = dma.done [#allocation6], 16
        $region64: #{tpu_custom_call.1} parent=51 // pred_fallthru
          _
        // Predicated region
        $region65: #{tpu_custom_call.1} parent=51 // pred_check
          %p450 = pneg %p133
        $region66: #{tpu_custom_call.1} parent=51 // pred_check_branch
          %452 = sbr.rel (%p450) target = $region68
        $region67: #{tpu_custom_call.1} parent=51 // pred_region
          %453 = dma.done [#allocation9], 256
        $region68: #{tpu_custom_call.1} parent=51 // pred_fallthru
          _
        // Predicated region
        $region69: #{tpu_custom_call.1} parent=51 // pred_check
          %p454 = pneg %p154
        $region70: #{tpu_custom_call.1} parent=51 // pred_check_branch
          %456 = sbr.rel (%p454) target = $region72
        $region71: #{tpu_custom_call.1} parent=51 // pred_region
          %457 = dma.done [#allocation9], 16
        $region72: #{tpu_custom_call.1} parent=51 // pred_fallthru
          _
        // Predicated region
        $region73: #{tpu_custom_call.1} parent=51 // pred_check
          %p458 = pneg %p175
        $region74: #{tpu_custom_call.1} parent=51 // pred_check_branch
          %460 = sbr.rel (%p458) target = $region76
        $region75: #{tpu_custom_call.1} parent=51 // pred_region
          %461 = dma.done [#allocation12], 256
        $region76: #{tpu_custom_call.1} parent=51 // pred_fallthru
          _
        // Predicated region
        $region77: #{tpu_custom_call.1} parent=51 // pred_check
          %p462 = pneg %p196
        $region78: #{tpu_custom_call.1} parent=51 // pred_check_branch
          %464 = sbr.rel (%p462) target = $region80
        $region79: #{tpu_custom_call.1} parent=51 // pred_region
          %465 = dma.done [#allocation12], 256
        $region80: #{tpu_custom_call.1} parent=51 // pred_fallthru
          _
        // Predicated region
        $region81: #{tpu_custom_call.1} parent=51 // pred_check
          %p466 = pneg %p217
        $region82: #{tpu_custom_call.1} parent=51 // pred_check_branch
          %468 = sbr.rel (%p466) target = $region84
        $region83: #{tpu_custom_call.1} parent=51 // pred_region
          %469 = dma.done [#allocation15], 16
        $region84: #{tpu_custom_call.1} parent=51 // pred_fallthru
          _
        %s470 = sand.u32 %s57, 1
        %s471 = scalar_lea.sflag [#allocation3], %s470
        %s472 = sand.u32 %s57, 1
        %s473 = smul.addr %s472, 16
        %s474 = scalar_lea.vmem [#allocation2], %s473
        %p475 = pneg %p70
        %p476 = pneg %p67
        %p477 = pneg %p91
        %p478 = pneg %p88
        %p479 = pneg %p112
        %p480 = pneg %p109
        %p481 = pneg %p133
        %p482 = pneg %p130
        %p483 = pneg %p154
        %p484 = pneg %p151
        %p485 = pneg %p175
        %p486 = pneg %p172
        %p487 = pneg %p196
        %p488 = pneg %p193
        %p489 = pneg %p217
        %p490 = pneg %p214
        %p491 = pneg %p245
        %p492 = pneg %p242
        %s493 = sand.u32 %s232, 1
        %s494 = scalar_lea.sflag [#allocation4], %s493
        %s495 = sand.u32 %s232, 1
        %s496 = smul.addr %s495, 32
        %s497 = scalar_lea.vmem [#allocation16], %s496
        %p498 = pneg %p273
        %p499 = pneg %p270
        %s500 = sand.u32 %s35, 1
        %s501 = scalar_lea.sflag [#allocation18], %s500
        %s502 = sand.u32 %s260, 1
        %s503 = smul.addr %s502, 32
        %s504 = scalar_lea.vmem [#allocation17], %s503
        %p505 = pneg %p301
        %p506 = pneg %p298
        %s507 = sand.u32 %s35, 1
        %s508 = scalar_lea.sflag [#allocation18], %s507
        %s509 = sand.u32 %s288, 1
        %s510 = smul.addr %s509, 32
        %s511 = scalar_lea.vmem [#allocation19], %s510
        %s512 = smul.u32 2, %s40
        %s513 = smul.u32 2, %s40
        %s514 = smul.u32 2, %s40
        %s515 = smul.u32 2, %s40
        %v517 = vld [vmem:[%s437] sm:$0xff]
        %v518 = vld [vmem:[%s437 + $0x8] sm:$0xff]
        %v519 = vld [vmem:[#allocation5] sm:$0x1]
        %v520 = vld [vmem:[#allocation7] sm:$0x1]
        %vm521 = vcmask 261120
        %v522 = vsel %vm521, %v517, 0.0
        %523 = vadd.xlane.f32.xlu0 %v522
        %v524 = vpop.xlane.xlu0 %523
        %v525 = vsel %vm521, %v518, 0.0
        %526 = vadd.xlane.f32.xlu0 %v525
        %v527 = vpop.xlane.xlu0 %526
        %v528 = vrcp.pop 32.0
        %v529 = vmul.f32 %v524, %v528
        %v530 = vmul.f32 %v527, %v528
        %v531 = vsub.f32 %v517, %v529
        %v532 = vsub.f32 %v518, %v530
        %v533 = vmul.f32 %v531, %v531
        %v534 = vmul.f32 %v532, %v532
        %v535 = vsel %vm521, %v533, 0.0
        %536 = vadd.xlane.f32.xlu0 %v535
        %v537 = vpop.xlane.xlu0 %536
        %v538 = vsel %vm521, %v534, 0.0
        %539 = vadd.xlane.f32.xlu0 %v538
        %v540 = vpop.xlane.xlu0 %539
        %v541 = vmul.f32 %v537, %v528
        %v542 = vmul.f32 %v540, %v528
        %v543 = vadd.f32 %v541, 1e-05
        %v544 = vadd.f32 %v542, 1e-05
        %v545 = vrsqrt.pop %v543
        %v546 = vrsqrt.pop %v544
        %v547 = vmul.f32 %v531, %v545
        %v548 = vmul.f32 %v532, %v546
        %v550 = vlaneseq
        %v551 = vshrl.u32 %v550, 7
        %v552 = vsub.s32 0, %v551
        %v553 = vrot.slane %v519, %v552
        %v555 = vmul.f32 %v547, %v553
        %v556 = vmul.f32 %v548, %v553
        %v558 = vlaneseq
        %v559 = vshrl.u32 %v558, 7
        %v560 = vsub.s32 0, %v559
        %v561 = vrot.slane %v520, %v560
        %v563 = vadd.f32 %v555, %v561
        %v564 = vadd.f32 %v556, %v561
        %v565 = vpack.c.bf16 %v564, %v563
        %v566 = vld [vmem:[#allocation8] sm:$0xf]
        %v567 = vld [vmem:[#allocation8 + $0x4] sm:$0xf]
        %v568 = vld [vmem:[#allocation8 + $0x8] sm:$0xf]
        %v569 = vld [vmem:[#allocation8 + $0xc] sm:$0xf]
        %v570 = vld [vmem:[#allocation10] sm:$0x1]
        %v572 = vlaneseq
        %v573 = vshrl.u32 %v572, 7
        %v574 = vsub.s32 0, %v573
        %v575 = vrot.slane %v570, %v574
        %v581 = vunpack.c.l.b16 %v566
        %v582 = vunpack.c.l.b16 %v567
        %v583 = vunpack.c.l.b16 %v568
        %v584 = vunpack.c.l.b16 %v569
        %v585 = vpack.c.b16 %v582, %v581
        %v586 = vpack.c.b16 %v584, %v583
        %v590 = vsel %vm521, %v565, 0
        %592 = vmatprep.subr.bf16.mxu0 0
        %593 = vmatpush1.bf16.msra.mxu0 %v585
        %594 = vmatprep.subr.bf16.mxu0 0
        %595 = vmatpush1.bf16.msra.mxu0 %v586
        %596 = vmatprep.subr.bf16.mxu0 0
        %597 = vmatpush1.bf16.msra.mxu0 0
        %598 = vmatprep.subr.bf16.mxu0 0
        %599 = vmatpush1.bf16.msra.mxu0 0
        %600 = vmatprep.subr.bf16.mxu0 0
        %601 = vmatpush1.bf16.msra.mxu0 0
        %602 = vmatprep.subr.bf16.mxu0 0
        %603 = vmatpush1.bf16.msra.mxu0 0
        %604 = vmatprep.subr.bf16.mxu0 0
        %605 = vmatpush1.bf16.msra.mxu0 0
        %606 = vmatprep.subr.bf16.mxu0 0
        %607 = vmatpush1.bf16.msra.mxu0 0
        %608 = vmatprep.subr.bf16.mxu0 0
        %609 = vmatpush1.bf16.msra.mxu0 0
        %610 = vmatprep.subr.bf16.mxu0 0
        %611 = vmatpush1.bf16.msra.mxu0 0
        %612 = vmatprep.subr.bf16.mxu0 0
        %613 = vmatpush1.bf16.msra.mxu0 0
        %614 = vmatprep.subr.bf16.mxu0 0
        %615 = vmatpush1.bf16.msra.mxu0 0
        %616 = vmatprep.subr.bf16.mxu0 0
        %617 = vmatpush1.bf16.msra.mxu0 0
        %618 = vmatprep.subr.bf16.mxu0 0
        %619 = vmatpush1.bf16.msra.mxu0 0
        %620 = vmatprep.subr.bf16.mxu0 0
        %621 = vmatpush1.bf16.msra.mxu0 0
        %622 = vmatprep.subr.bf16.mxu0 0
        %623 = vmatpush1.bf16.msra.mxu0 0
        %624 = vmatprep.mubr.bf16.mxu0 0
        %625 = vmatmul.mubr.bf16.gmra.mrb[0].mxu0 %v590
        %v626 = vpop.f32.mrb[0].mxu0
        %v627 = vadd.f32 %v575, %v626
        %v628 = vpop.f32.mrb[0].mxu0
        %v629 = vpop.f32.mrb[0].mxu0
        %v630 = vadd.f32 %v575, %v629
        %v631 = vpop.f32.mrb[0].mxu0
        %632 = vdwg.mxu0
        %v633 = vld [vmem:[#allocation11] sm:$0xf]
        %v634 = vld [vmem:[#allocation11 + $0x4] sm:$0xf]
        %v635 = vld [vmem:[#allocation11 + $0x8] sm:$0xf]
        %v636 = vld [vmem:[#allocation11 + $0xc] sm:$0xf]
        %v641 = vunpack.c.l.b16 %v633
        %v642 = vunpack.c.l.b16 %v634
        %v643 = vunpack.c.l.b16 %v635
        %v644 = vunpack.c.l.b16 %v636
        %v645 = vpack.c.b16 %v642, %v641
        %v646 = vpack.c.b16 %v644, %v643
        %649 = vmatprep.subr.bf16.mxu0 0
        %650 = vmatpush1.bf16.msra.mxu0 %v645
        %651 = vmatprep.subr.bf16.mxu0 0
        %652 = vmatpush1.bf16.msra.mxu0 %v646
        %653 = vmatprep.subr.bf16.mxu0 0
        %654 = vmatpush1.bf16.msra.mxu0 0
        %655 = vmatprep.subr.bf16.mxu0 0
        %656 = vmatpush1.bf16.msra.mxu0 0
        %657 = vmatprep.subr.bf16.mxu0 0
        %658 = vmatpush1.bf16.msra.mxu0 0
        %659 = vmatprep.subr.bf16.mxu0 0
        %660 = vmatpush1.bf16.msra.mxu0 0
        %661 = vmatprep.subr.bf16.mxu0 0
        %662 = vmatpush1.bf16.msra.mxu0 0
        %663 = vmatprep.subr.bf16.mxu0 0
        %664 = vmatpush1.bf16.msra.mxu0 0
        %665 = vmatprep.subr.bf16.mxu0 0
        %666 = vmatpush1.bf16.msra.mxu0 0
        %667 = vmatprep.subr.bf16.mxu0 0
        %668 = vmatpush1.bf16.msra.mxu0 0
        %669 = vmatprep.subr.bf16.mxu0 0
        %670 = vmatpush1.bf16.msra.mxu0 0
        %671 = vmatprep.subr.bf16.mxu0 0
        %672 = vmatpush1.bf16.msra.mxu0 0
        %673 = vmatprep.subr.bf16.mxu0 0
        %674 = vmatpush1.bf16.msra.mxu0 0
        %675 = vmatprep.subr.bf16.mxu0 0
        %676 = vmatpush1.bf16.msra.mxu0 0
        %677 = vmatprep.subr.bf16.mxu0 0
        %678 = vmatpush1.bf16.msra.mxu0 0
        %679 = vmatprep.subr.bf16.mxu0 0
        %680 = vmatpush1.bf16.msra.mxu0 0
        %681 = vmatprep.mubr.bf16.mxu0 0
        %682 = vmatmul.mubr.bf16.gmra.mrb[0].mxu0 %v590
        %v683 = vpop.f32.mrb[0].mxu0
        %v684 = vadd.f32 0.0, %v683
        %v685 = vpop.f32.mrb[0].mxu0
        %v686 = vpop.f32.mrb[0].mxu0
        %v687 = vadd.f32 0.0, %v686
        %v688 = vpop.f32.mrb[0].mxu0
        %689 = vdwg.mxu0
        %v690 = vld [vmem:[#allocation13] sm:$0xf]
        %v691 = vld [vmem:[#allocation13 + $0x4] sm:$0xf]
        %v692 = vld [vmem:[#allocation13 + $0x8] sm:$0xf]
        %v693 = vld [vmem:[#allocation13 + $0xc] sm:$0xf]
        %v694 = vld [vmem:[#allocation14] sm:$0x1]
        %v696 = vlaneseq
        %v697 = vshrl.u32 %v696, 7
        %v698 = vsub.s32 0, %v697
        %v699 = vrot.slane %v694, %v698
        %v705 = vunpack.c.l.b16 %v690
        %v706 = vunpack.c.l.b16 %v691
        %v707 = vunpack.c.l.b16 %v692
        %v708 = vunpack.c.l.b16 %v693
        %v709 = vpack.c.b16 %v706, %v705
        %v710 = vpack.c.b16 %v708, %v707
        %713 = vmatprep.subr.bf16.mxu0 0
        %714 = vmatpush1.bf16.msra.mxu0 %v709
        %715 = vmatprep.subr.bf16.mxu0 0
        %716 = vmatpush1.bf16.msra.mxu0 %v710
        %717 = vmatprep.subr.bf16.mxu0 0
        %718 = vmatpush1.bf16.msra.mxu0 0
        %719 = vmatprep.subr.bf16.mxu0 0
        %720 = vmatpush1.bf16.msra.mxu0 0
        %721 = vmatprep.subr.bf16.mxu0 0
        %722 = vmatpush1.bf16.msra.mxu0 0
        %723 = vmatprep.subr.bf16.mxu0 0
        %724 = vmatpush1.bf16.msra.mxu0 0
        %725 = vmatprep.subr.bf16.mxu0 0
        %726 = vmatpush1.bf16.msra.mxu0 0
        %727 = vmatprep.subr.bf16.mxu0 0
        %728 = vmatpush1.bf16.msra.mxu0 0
        %729 = vmatprep.subr.bf16.mxu0 0
        %730 = vmatpush1.bf16.msra.mxu0 0
        %731 = vmatprep.subr.bf16.mxu0 0
        %732 = vmatpush1.bf16.msra.mxu0 0
        %733 = vmatprep.subr.bf16.mxu0 0
        %734 = vmatpush1.bf16.msra.mxu0 0
        %735 = vmatprep.subr.bf16.mxu0 0
        %736 = vmatpush1.bf16.msra.mxu0 0
        %737 = vmatprep.subr.bf16.mxu0 0
        %738 = vmatpush1.bf16.msra.mxu0 0
        %739 = vmatprep.subr.bf16.mxu0 0
        %740 = vmatpush1.bf16.msra.mxu0 0
        %741 = vmatprep.subr.bf16.mxu0 0
        %742 = vmatpush1.bf16.msra.mxu0 0
        %743 = vmatprep.subr.bf16.mxu0 0
        %744 = vmatpush1.bf16.msra.mxu0 0
        %745 = vmatprep.mubr.bf16.mxu0 0
        %746 = vmatmul.mubr.bf16.gmra.mrb[0].mxu0 %v590
        %v747 = vpop.f32.mrb[0].mxu0
        %v748 = vadd.f32 %v699, %v747
        %v749 = vpop.f32.mrb[0].mxu0
        %v750 = vpop.f32.mrb[0].mxu0
        %v751 = vadd.f32 %v699, %v750
        %v752 = vpop.f32.mrb[0].mxu0
        %753 = vdwg.mxu0
        %v754 = vmul.f32 %v627, 0.35355338
        %v755 = vmul.f32 %v630, 0.35355338
        %758 = vrot.lane.b32.xlu0 %v754, 120
        %v759 = vpop.permute.xlu0 %758
        %760 = vrot.lane.b32.xlu0 %v755, 120
        %v761 = vpop.permute.xlu0 %760
        %764 = vrot.lane.b32.xlu0 %v754, 112
        %v765 = vpop.permute.xlu0 %764
        %766 = vrot.lane.b32.xlu0 %v755, 112
        %v767 = vpop.permute.xlu0 %766
        %770 = vrot.lane.b32.xlu0 %v754, 104
        %v771 = vpop.permute.xlu0 %770
        %772 = vrot.lane.b32.xlu0 %v755, 104
        %v773 = vpop.permute.xlu0 %772
        %v776 = vcombine.low %v754, %v765
        %v777 = vcombine.high %v754, %v765
        %v779 = vunpack.c.l.s4 1983009808
        %v780 = vunpack.c.0.s8 %v779
        %v781 = vlaneseq
        %v782 = vshrl.u32 %v781, 7
        %v783 = vsub.s32 %v780, %v782
        %v784 = vrot.slane %v776, %v783
        %v786 = vunpack.c.l.s4 1983009808
        %v787 = vunpack.c.0.s8 %v786
        %v788 = vlaneseq
        %v789 = vshrl.u32 %v788, 7
        %v790 = vsub.s32 %v787, %v789
        %v791 = vrot.slane %v777, %v790
        %v792 = vcombine.low %v759, %v771
        %v793 = vcombine.high %v759, %v771
        %v795 = vunpack.c.l.s4 1983009808
        %v796 = vunpack.c.0.s8 %v795
        %v797 = vlaneseq
        %v798 = vshrl.u32 %v797, 7
        %v799 = vsub.s32 %v796, %v798
        %v800 = vrot.slane %v792, %v799
        %v802 = vunpack.c.l.s4 1983009808
        %v803 = vunpack.c.0.s8 %v802
        %v804 = vlaneseq
        %v805 = vshrl.u32 %v804, 7
        %v806 = vsub.s32 %v803, %v805
        %v807 = vrot.slane %v793, %v806
        %v808 = vcombine.low %v784, %v800
        %v809 = vcombine.high %v784, %v800
        %v811 = vunpack.c.l.s4 1934713408
        %v812 = vunpack.c.0.s8 %v811
        %v813 = vlaneseq
        %v814 = vshrl.u32 %v813, 7
        %v815 = vsub.s32 %v812, %v814
        %v816 = vrot.slane %v808, %v815
        %v818 = vunpack.c.l.s4 1934713408
        %v819 = vunpack.c.0.s8 %v818
        %v820 = vlaneseq
        %v821 = vshrl.u32 %v820, 7
        %v822 = vsub.s32 %v819, %v821
        %v823 = vrot.slane %v809, %v822
        %v824 = vcombine.low %v791, %v807
        %v825 = vcombine.high %v791, %v807
        %v827 = vunpack.c.l.s4 1934713408
        %v828 = vunpack.c.0.s8 %v827
        %v829 = vlaneseq
        %v830 = vshrl.u32 %v829, 7
        %v831 = vsub.s32 %v828, %v830
        %v832 = vrot.slane %v824, %v831
        %v834 = vunpack.c.l.s4 1934713408
        %v835 = vunpack.c.0.s8 %v834
        %v836 = vlaneseq
        %v837 = vshrl.u32 %v836, 7
        %v838 = vsub.s32 %v835, %v837
        %v839 = vrot.slane %v825, %v838
        %v840 = vcombine.high %v816, 0.0
        %v841 = vcombine.high %v823, 0.0
        %v842 = vcombine.high %v832, 0.0
        %v843 = vcombine.high %v839, 0.0
        %v844 = vcombine.low %v755, %v767
        %v845 = vcombine.high %v755, %v767
        %v847 = vunpack.c.l.s4 1983009808
        %v848 = vunpack.c.0.s8 %v847
        %v849 = vlaneseq
        %v850 = vshrl.u32 %v849, 7
        %v851 = vsub.s32 %v848, %v850
        %v852 = vrot.slane %v844, %v851
        %v854 = vunpack.c.l.s4 1983009808
        %v855 = vunpack.c.0.s8 %v854
        %v856 = vlaneseq
        %v857 = vshrl.u32 %v856, 7
        %v858 = vsub.s32 %v855, %v857
        %v859 = vrot.slane %v845, %v858
        %v860 = vcombine.low %v761, %v773
        %v861 = vcombine.high %v761, %v773
        %v863 = vunpack.c.l.s4 1983009808
        %v864 = vunpack.c.0.s8 %v863
        %v865 = vlaneseq
        %v866 = vshrl.u32 %v865, 7
        %v867 = vsub.s32 %v864, %v866
        %v868 = vrot.slane %v860, %v867
        %v870 = vunpack.c.l.s4 1983009808
        %v871 = vunpack.c.0.s8 %v870
        %v872 = vlaneseq
        %v873 = vshrl.u32 %v872, 7
        %v874 = vsub.s32 %v871, %v873
        %v875 = vrot.slane %v861, %v874
        %v876 = vcombine.low %v852, %v868
        %v877 = vcombine.high %v852, %v868
        %v879 = vunpack.c.l.s4 1934713408
        %v880 = vunpack.c.0.s8 %v879
        %v881 = vlaneseq
        %v882 = vshrl.u32 %v881, 7
        %v883 = vsub.s32 %v880, %v882
        %v884 = vrot.slane %v876, %v883
        %v886 = vunpack.c.l.s4 1934713408
        %v887 = vunpack.c.0.s8 %v886
        %v888 = vlaneseq
        %v889 = vshrl.u32 %v888, 7
        %v890 = vsub.s32 %v887, %v889
        %v891 = vrot.slane %v877, %v890
        %v892 = vcombine.low %v859, %v875
        %v893 = vcombine.high %v859, %v875
        %v895 = vunpack.c.l.s4 1934713408
        %v896 = vunpack.c.0.s8 %v895
        %v897 = vlaneseq
        %v898 = vshrl.u32 %v897, 7
        %v899 = vsub.s32 %v896, %v898
        %v900 = vrot.slane %v892, %v899
        %v902 = vunpack.c.l.s4 1934713408
        %v903 = vunpack.c.0.s8 %v902
        %v904 = vlaneseq
        %v905 = vshrl.u32 %v904, 7
        %v906 = vsub.s32 %v903, %v905
        %v907 = vrot.slane %v893, %v906
        %v908 = vcombine.high %v884, 0.0
        %v909 = vcombine.high %v891, 0.0
        %v910 = vcombine.high %v900, 0.0
        %v911 = vcombine.high %v907, 0.0
        %v912 = vcombine.low %v816, %v823
        %v914 = vunpack.c.l.s4 1983009808
        %v915 = vunpack.c.0.s8 %v914
        %v916 = vlaneseq
        %v917 = vshrl.u32 %v916, 7
        %v918 = vsub.s32 %v915, %v917
        %v919 = vrot.slane %v912, %v918
        %v920 = vcombine.low %v840, %v841
        %v922 = vunpack.c.l.s4 1983009808
        %v923 = vunpack.c.0.s8 %v922
        %v924 = vlaneseq
        %v925 = vshrl.u32 %v924, 7
        %v926 = vsub.s32 %v923, %v925
        %v927 = vrot.slane %v920, %v926
        %v928 = vcombine.low %v832, %v839
        %v930 = vunpack.c.l.s4 1983009808
        %v931 = vunpack.c.0.s8 %v930
        %v932 = vlaneseq
        %v933 = vshrl.u32 %v932, 7
        %v934 = vsub.s32 %v931, %v933
        %v935 = vrot.slane %v928, %v934
        %v936 = vcombine.low %v842, %v843
        %v938 = vunpack.c.l.s4 1983009808
        %v939 = vunpack.c.0.s8 %v938
        %v940 = vlaneseq
        %v941 = vshrl.u32 %v940, 7
        %v942 = vsub.s32 %v939, %v941
        %v943 = vrot.slane %v936, %v942
        %v944 = vcombine.low %v919, %v927
        %v945 = vcombine.high %v919, %v927
        %v947 = vunpack.c.l.s4 1934713408
        %v948 = vunpack.c.0.s8 %v947
        %v949 = vlaneseq
        %v950 = vshrl.u32 %v949, 7
        %v951 = vsub.s32 %v948, %v950
        %v952 = vrot.slane %v944, %v951
        %v954 = vunpack.c.l.s4 1934713408
        %v955 = vunpack.c.0.s8 %v954
        %v956 = vlaneseq
        %v957 = vshrl.u32 %v956, 7
        %v958 = vsub.s32 %v955, %v957
        %v959 = vrot.slane %v945, %v958
        %v960 = vcombine.low %v935, %v943
        %v961 = vcombine.high %v935, %v943
        %v963 = vunpack.c.l.s4 1934713408
        %v964 = vunpack.c.0.s8 %v963
        %v965 = vlaneseq
        %v966 = vshrl.u32 %v965, 7
        %v967 = vsub.s32 %v964, %v966
        %v968 = vrot.slane %v960, %v967
        %v970 = vunpack.c.l.s4 1934713408
        %v971 = vunpack.c.0.s8 %v970
        %v972 = vlaneseq
        %v973 = vshrl.u32 %v972, 7
        %v974 = vsub.s32 %v971, %v973
        %v975 = vrot.slane %v961, %v974
        %v976 = vcombine.low %v952, %v968
        %v977 = vcombine.high %v952, %v968
        %v978 = vcombine.low %v959, %v975
        %v979 = vcombine.high %v959, %v975
        %v980 = vcombine.low %v884, %v891
        %v982 = vunpack.c.l.s4 1983009808
        %v983 = vunpack.c.0.s8 %v982
        %v984 = vlaneseq
        %v985 = vshrl.u32 %v984, 7
        %v986 = vsub.s32 %v983, %v985
        %v987 = vrot.slane %v980, %v986
        %v988 = vcombine.low %v908, %v909
        %v990 = vunpack.c.l.s4 1983009808
        %v991 = vunpack.c.0.s8 %v990
        %v992 = vlaneseq
        %v993 = vshrl.u32 %v992, 7
        %v994 = vsub.s32 %v991, %v993
        %v995 = vrot.slane %v988, %v994
        %v996 = vcombine.low %v900, %v907
        %v998 = vunpack.c.l.s4 1983009808
        %v999 = vunpack.c.0.s8 %v998
        %v1000 = vlaneseq
        %v1001 = vshrl.u32 %v1000, 7
        %v1002 = vsub.s32 %v999, %v1001
        %v1003 = vrot.slane %v996, %v1002
        %v1004 = vcombine.low %v910, %v911
        %v1006 = vunpack.c.l.s4 1983009808
        %v1007 = vunpack.c.0.s8 %v1006
        %v1008 = vlaneseq
        %v1009 = vshrl.u32 %v1008, 7
        %v1010 = vsub.s32 %v1007, %v1009
        %v1011 = vrot.slane %v1004, %v1010
        %v1012 = vcombine.low %v987, %v995
        %v1013 = vcombine.high %v987, %v995
        %v1015 = vunpack.c.l.s4 1934713408
        %v1016 = vunpack.c.0.s8 %v1015
        %v1017 = vlaneseq
        %v1018 = vshrl.u32 %v1017, 7
        %v1019 = vsub.s32 %v1016, %v1018
        %v1020 = vrot.slane %v1012, %v1019
        %v1022 = vunpack.c.l.s4 1934713408
        %v1023 = vunpack.c.0.s8 %v1022
        %v1024 = vlaneseq
        %v1025 = vshrl.u32 %v1024, 7
        %v1026 = vsub.s32 %v1023, %v1025
        %v1027 = vrot.slane %v1013, %v1026
        %v1028 = vcombine.low %v1003, %v1011
        %v1029 = vcombine.high %v1003, %v1011
        %v1031 = vunpack.c.l.s4 1934713408
        %v1032 = vunpack.c.0.s8 %v1031
        %v1033 = vlaneseq
        %v1034 = vshrl.u32 %v1033, 7
        %v1035 = vsub.s32 %v1032, %v1034
        %v1036 = vrot.slane %v1028, %v1035
        %v1038 = vunpack.c.l.s4 1934713408
        %v1039 = vunpack.c.0.s8 %v1038
        %v1040 = vlaneseq
        %v1041 = vshrl.u32 %v1040, 7
        %v1042 = vsub.s32 %v1039, %v1041
        %v1043 = vrot.slane %v1029, %v1042
        %v1044 = vcombine.low %v1020, %v1036
        %v1045 = vcombine.high %v1020, %v1036
        %v1046 = vcombine.low %v1027, %v1043
        %v1047 = vcombine.high %v1027, %v1043
        %v1048 = vpack.c.bf16 %v1044, %v976
        %v1049 = vpack.c.bf16 %v1045, %v977
        %v1050 = vpack.c.bf16 %v1046, %v978
        %v1051 = vpack.c.bf16 %v1047, %v979
        %v1056 = vunpack.c.l.b16 %v1048
        %v1057 = vunpack.c.h.b16 %v1048
        %v1058 = vunpack.c.l.b16 %v1049
        %v1059 = vunpack.c.h.b16 %v1049
        %v1060 = vunpack.c.l.b16 %v1050
        %v1061 = vunpack.c.h.b16 %v1050
        %v1062 = vunpack.c.l.b16 %v1051
        %v1063 = vunpack.c.h.b16 %v1051
        %v1064 = vpack.c.b16 %v1056, %v1056
        %v1065 = vpack.c.b16 %v1057, %v1057
        %v1066 = vpack.c.b16 %v1058, %v1058
        %v1067 = vpack.c.b16 %v1059, %v1059
        %v1068 = vpack.c.b16 %v1060, %v1060
        %v1069 = vpack.c.b16 %v1061, %v1061
        %v1070 = vpack.c.b16 %v1062, %v1062
        %v1071 = vpack.c.b16 %v1063, %v1063
        %vm1080 = vcmask 60416
        %1081 = vst.msk [vmem:[%s497] sm:$0xf] %vm1080, %v1064
        %1082 = vst.msk [vmem:[%s497 + $0x4] sm:$0xf] %vm1080, %v1065
        %1083 = vst.msk [vmem:[%s497 + $0x8] sm:$0xf] %vm1080, %v1066
        %1084 = vst.msk [vmem:[%s497 + $0xc] sm:$0xf] %vm1080, %v1067
        %1085 = vst.msk [vmem:[%s497 + $0x10] sm:$0xf] %vm1080, %v1068
        %1086 = vst.msk [vmem:[%s497 + $0x14] sm:$0xf] %vm1080, %v1069
        %1087 = vst.msk [vmem:[%s497 + $0x18] sm:$0xf] %vm1080, %v1070
        %1088 = vst.msk [vmem:[%s497 + $0x1c] sm:$0xf] %vm1080, %v1071
        %1091 = vrot.lane.b32.xlu0 %v684, 120
        %v1092 = vpop.permute.xlu0 %1091
        %1093 = vrot.lane.b32.xlu0 %v687, 120
        %v1094 = vpop.permute.xlu0 %1093
        %1097 = vrot.lane.b32.xlu0 %v684, 112
        %v1098 = vpop.permute.xlu0 %1097
        %1099 = vrot.lane.b32.xlu0 %v687, 112
        %v1100 = vpop.permute.xlu0 %1099
        %1103 = vrot.lane.b32.xlu0 %v684, 104
        %v1104 = vpop.permute.xlu0 %1103
        %1105 = vrot.lane.b32.xlu0 %v687, 104
        %v1106 = vpop.permute.xlu0 %1105
        %v1109 = vcombine.low %v684, %v1098
        %v1110 = vcombine.high %v684, %v1098
        %v1112 = vunpack.c.l.s4 1983009808
        %v1113 = vunpack.c.0.s8 %v1112
        %v1114 = vlaneseq
        %v1115 = vshrl.u32 %v1114, 7
        %v1116 = vsub.s32 %v1113, %v1115
        %v1117 = vrot.slane %v1109, %v1116
        %v1119 = vunpack.c.l.s4 1983009808
        %v1120 = vunpack.c.0.s8 %v1119
        %v1121 = vlaneseq
        %v1122 = vshrl.u32 %v1121, 7
        %v1123 = vsub.s32 %v1120, %v1122
        %v1124 = vrot.slane %v1110, %v1123
        %v1125 = vcombine.low %v1092, %v1104
        %v1126 = vcombine.high %v1092, %v1104
        %v1128 = vunpack.c.l.s4 1983009808
        %v1129 = vunpack.c.0.s8 %v1128
        %v1130 = vlaneseq
        %v1131 = vshrl.u32 %v1130, 7
        %v1132 = vsub.s32 %v1129, %v1131
        %v1133 = vrot.slane %v1125, %v1132
        %v1135 = vunpack.c.l.s4 1983009808
        %v1136 = vunpack.c.0.s8 %v1135
        %v1137 = vlaneseq
        %v1138 = vshrl.u32 %v1137, 7
        %v1139 = vsub.s32 %v1136, %v1138
        %v1140 = vrot.slane %v1126, %v1139
        %v1141 = vcombine.low %v1117, %v1133
        %v1142 = vcombine.high %v1117, %v1133
        %v1144 = vunpack.c.l.s4 1934713408
        %v1145 = vunpack.c.0.s8 %v1144
        %v1146 = vlaneseq
        %v1147 = vshrl.u32 %v1146, 7
        %v1148 = vsub.s32 %v1145, %v1147
        %v1149 = vrot.slane %v1141, %v1148
        %v1151 = vunpack.c.l.s4 1934713408
        %v1152 = vunpack.c.0.s8 %v1151
        %v1153 = vlaneseq
        %v1154 = vshrl.u32 %v1153, 7
        %v1155 = vsub.s32 %v1152, %v1154
        %v1156 = vrot.slane %v1142, %v1155
        %v1157 = vcombine.low %v1124, %v1140
        %v1158 = vcombine.high %v1124, %v1140
        %v1160 = vunpack.c.l.s4 1934713408
        %v1161 = vunpack.c.0.s8 %v1160
        %v1162 = vlaneseq
        %v1163 = vshrl.u32 %v1162, 7
        %v1164 = vsub.s32 %v1161, %v1163
        %v1165 = vrot.slane %v1157, %v1164
        %v1167 = vunpack.c.l.s4 1934713408
        %v1168 = vunpack.c.0.s8 %v1167
        %v1169 = vlaneseq
        %v1170 = vshrl.u32 %v1169, 7
        %v1171 = vsub.s32 %v1168, %v1170
        %v1172 = vrot.slane %v1158, %v1171
        %v1173 = vcombine.high %v1149, 0.0
        %v1174 = vcombine.high %v1156, 0.0
        %v1175 = vcombine.high %v1165, 0.0
        %v1176 = vcombine.high %v1172, 0.0
        %v1177 = vcombine.low %v687, %v1100
        %v1178 = vcombine.high %v687, %v1100
        %v1180 = vunpack.c.l.s4 1983009808
        %v1181 = vunpack.c.0.s8 %v1180
        %v1182 = vlaneseq
        %v1183 = vshrl.u32 %v1182, 7
        %v1184 = vsub.s32 %v1181, %v1183
        %v1185 = vrot.slane %v1177, %v1184
        %v1187 = vunpack.c.l.s4 1983009808
        %v1188 = vunpack.c.0.s8 %v1187
        %v1189 = vlaneseq
        %v1190 = vshrl.u32 %v1189, 7
        %v1191 = vsub.s32 %v1188, %v1190
        %v1192 = vrot.slane %v1178, %v1191
        %v1193 = vcombine.low %v1094, %v1106
        %v1194 = vcombine.high %v1094, %v1106
        %v1196 = vunpack.c.l.s4 1983009808
        %v1197 = vunpack.c.0.s8 %v1196
        %v1198 = vlaneseq
        %v1199 = vshrl.u32 %v1198, 7
        %v1200 = vsub.s32 %v1197, %v1199
        %v1201 = vrot.slane %v1193, %v1200
        %v1203 = vunpack.c.l.s4 1983009808
        %v1204 = vunpack.c.0.s8 %v1203
        %v1205 = vlaneseq
        %v1206 = vshrl.u32 %v1205, 7
        %v1207 = vsub.s32 %v1204, %v1206
        %v1208 = vrot.slane %v1194, %v1207
        %v1209 = vcombine.low %v1185, %v1201
        %v1210 = vcombine.high %v1185, %v1201
        %v1212 = vunpack.c.l.s4 1934713408
        %v1213 = vunpack.c.0.s8 %v1212
        %v1214 = vlaneseq
        %v1215 = vshrl.u32 %v1214, 7
        %v1216 = vsub.s32 %v1213, %v1215
        %v1217 = vrot.slane %v1209, %v1216
        %v1219 = vunpack.c.l.s4 1934713408
        %v1220 = vunpack.c.0.s8 %v1219
        %v1221 = vlaneseq
        %v1222 = vshrl.u32 %v1221, 7
        %v1223 = vsub.s32 %v1220, %v1222
        %v1224 = vrot.slane %v1210, %v1223
        %v1225 = vcombine.low %v1192, %v1208
        %v1226 = vcombine.high %v1192, %v1208
        %v1228 = vunpack.c.l.s4 1934713408
        %v1229 = vunpack.c.0.s8 %v1228
        %v1230 = vlaneseq
        %v1231 = vshrl.u32 %v1230, 7
        %v1232 = vsub.s32 %v1229, %v1231
        %v1233 = vrot.slane %v1225, %v1232
        %v1235 = vunpack.c.l.s4 1934713408
        %v1236 = vunpack.c.0.s8 %v1235
        %v1237 = vlaneseq
        %v1238 = vshrl.u32 %v1237, 7
        %v1239 = vsub.s32 %v1236, %v1238
        %v1240 = vrot.slane %v1226, %v1239
        %v1241 = vcombine.high %v1217, 0.0
        %v1242 = vcombine.high %v1224, 0.0
        %v1243 = vcombine.high %v1233, 0.0
        %v1244 = vcombine.high %v1240, 0.0
        %v1245 = vcombine.low %v1149, %v1156
        %v1247 = vunpack.c.l.s4 1983009808
        %v1248 = vunpack.c.0.s8 %v1247
        %v1249 = vlaneseq
        %v1250 = vshrl.u32 %v1249, 7
        %v1251 = vsub.s32 %v1248, %v1250
        %v1252 = vrot.slane %v1245, %v1251
        %v1253 = vcombine.low %v1173, %v1174
        %v1255 = vunpack.c.l.s4 1983009808
        %v1256 = vunpack.c.0.s8 %v1255
        %v1257 = vlaneseq
        %v1258 = vshrl.u32 %v1257, 7
        %v1259 = vsub.s32 %v1256, %v1258
        %v1260 = vrot.slane %v1253, %v1259
        %v1261 = vcombine.low %v1165, %v1172
        %v1263 = vunpack.c.l.s4 1983009808
        %v1264 = vunpack.c.0.s8 %v1263
        %v1265 = vlaneseq
        %v1266 = vshrl.u32 %v1265, 7
        %v1267 = vsub.s32 %v1264, %v1266
        %v1268 = vrot.slane %v1261, %v1267
        %v1269 = vcombine.low %v1175, %v1176
        %v1271 = vunpack.c.l.s4 1983009808
        %v1272 = vunpack.c.0.s8 %v1271
        %v1273 = vlaneseq
        %v1274 = vshrl.u32 %v1273, 7
        %v1275 = vsub.s32 %v1272, %v1274
        %v1276 = vrot.slane %v1269, %v1275
        %v1277 = vcombine.low %v1252, %v1260
        %v1278 = vcombine.high %v1252, %v1260
        %v1280 = vunpack.c.l.s4 1934713408
        %v1281 = vunpack.c.0.s8 %v1280
        %v1282 = vlaneseq
        %v1283 = vshrl.u32 %v1282, 7
        %v1284 = vsub.s32 %v1281, %v1283
        %v1285 = vrot.slane %v1277, %v1284
        %v1287 = vunpack.c.l.s4 1934713408
        %v1288 = vunpack.c.0.s8 %v1287
        %v1289 = vlaneseq
        %v1290 = vshrl.u32 %v1289, 7
        %v1291 = vsub.s32 %v1288, %v1290
        %v1292 = vrot.slane %v1278, %v1291
        %v1293 = vcombine.low %v1268, %v1276
        %v1294 = vcombine.high %v1268, %v1276
        %v1296 = vunpack.c.l.s4 1934713408
        %v1297 = vunpack.c.0.s8 %v1296
        %v1298 = vlaneseq
        %v1299 = vshrl.u32 %v1298, 7
        %v1300 = vsub.s32 %v1297, %v1299
        %v1301 = vrot.slane %v1293, %v1300
        %v1303 = vunpack.c.l.s4 1934713408
        %v1304 = vunpack.c.0.s8 %v1303
        %v1305 = vlaneseq
        %v1306 = vshrl.u32 %v1305, 7
        %v1307 = vsub.s32 %v1304, %v1306
        %v1308 = vrot.slane %v1294, %v1307
        %v1309 = vcombine.low %v1285, %v1301
        %v1310 = vcombine.high %v1285, %v1301
        %v1311 = vcombine.low %v1292, %v1308
        %v1312 = vcombine.high %v1292, %v1308
        %v1313 = vcombine.low %v1217, %v1224
        %v1315 = vunpack.c.l.s4 1983009808
        %v1316 = vunpack.c.0.s8 %v1315
        %v1317 = vlaneseq
        %v1318 = vshrl.u32 %v1317, 7
        %v1319 = vsub.s32 %v1316, %v1318
        %v1320 = vrot.slane %v1313, %v1319
        %v1321 = vcombine.low %v1241, %v1242
        %v1323 = vunpack.c.l.s4 1983009808
        %v1324 = vunpack.c.0.s8 %v1323
        %v1325 = vlaneseq
        %v1326 = vshrl.u32 %v1325, 7
        %v1327 = vsub.s32 %v1324, %v1326
        %v1328 = vrot.slane %v1321, %v1327
        %v1329 = vcombine.low %v1233, %v1240
        %v1331 = vunpack.c.l.s4 1983009808
        %v1332 = vunpack.c.0.s8 %v1331
        %v1333 = vlaneseq
        %v1334 = vshrl.u32 %v1333, 7
        %v1335 = vsub.s32 %v1332, %v1334
        %v1336 = vrot.slane %v1329, %v1335
        %v1337 = vcombine.low %v1243, %v1244
        %v1339 = vunpack.c.l.s4 1983009808
        %v1340 = vunpack.c.0.s8 %v1339
        %v1341 = vlaneseq
        %v1342 = vshrl.u32 %v1341, 7
        %v1343 = vsub.s32 %v1340, %v1342
        %v1344 = vrot.slane %v1337, %v1343
        %v1345 = vcombine.low %v1320, %v1328
        %v1346 = vcombine.high %v1320, %v1328
        %v1348 = vunpack.c.l.s4 1934713408
        %v1349 = vunpack.c.0.s8 %v1348
        %v1350 = vlaneseq
        %v1351 = vshrl.u32 %v1350, 7
        %v1352 = vsub.s32 %v1349, %v1351
        %v1353 = vrot.slane %v1345, %v1352
        %v1355 = vunpack.c.l.s4 1934713408
        %v1356 = vunpack.c.0.s8 %v1355
        %v1357 = vlaneseq
        %v1358 = vshrl.u32 %v1357, 7
        %v1359 = vsub.s32 %v1356, %v1358
        %v1360 = vrot.slane %v1346, %v1359
        %v1361 = vcombine.low %v1336, %v1344
        %v1362 = vcombine.high %v1336, %v1344
        %v1364 = vunpack.c.l.s4 1934713408
        %v1365 = vunpack.c.0.s8 %v1364
        %v1366 = vlaneseq
        %v1367 = vshrl.u32 %v1366, 7
        %v1368 = vsub.s32 %v1365, %v1367
        %v1369 = vrot.slane %v1361, %v1368
        %v1371 = vunpack.c.l.s4 1934713408
        %v1372 = vunpack.c.0.s8 %v1371
        %v1373 = vlaneseq
        %v1374 = vshrl.u32 %v1373, 7
        %v1375 = vsub.s32 %v1372, %v1374
        %v1376 = vrot.slane %v1362, %v1375
        %v1377 = vcombine.low %v1353, %v1369
        %v1378 = vcombine.high %v1353, %v1369
        %v1379 = vcombine.low %v1360, %v1376
        %v1380 = vcombine.high %v1360, %v1376
        %v1381 = vpack.c.bf16 %v1377, %v1309
        %v1382 = vpack.c.bf16 %v1378, %v1310
        %v1383 = vpack.c.bf16 %v1379, %v1311
        %v1384 = vpack.c.bf16 %v1380, %v1312
        %v1389 = vunpack.c.l.b16 %v1381
        %v1390 = vunpack.c.h.b16 %v1381
        %v1391 = vunpack.c.l.b16 %v1382
        %v1392 = vunpack.c.h.b16 %v1382
        %v1393 = vunpack.c.l.b16 %v1383
        %v1394 = vunpack.c.h.b16 %v1383
        %v1395 = vunpack.c.l.b16 %v1384
        %v1396 = vunpack.c.h.b16 %v1384
        %v1397 = vpack.c.b16 %v1389, %v1389
        %v1398 = vpack.c.b16 %v1390, %v1390
        %v1399 = vpack.c.b16 %v1391, %v1391
        %v1400 = vpack.c.b16 %v1392, %v1392
        %v1401 = vpack.c.b16 %v1393, %v1393
        %v1402 = vpack.c.b16 %v1394, %v1394
        %v1403 = vpack.c.b16 %v1395, %v1395
        %v1404 = vpack.c.b16 %v1396, %v1396
        %1413 = vst.msk [vmem:[%s504] sm:$0xf] %vm1080, %v1397
        %1414 = vst.msk [vmem:[%s504 + $0x4] sm:$0xf] %vm1080, %v1398
        %1415 = vst.msk [vmem:[%s504 + $0x8] sm:$0xf] %vm1080, %v1399
        %1416 = vst.msk [vmem:[%s504 + $0xc] sm:$0xf] %vm1080, %v1400
        %1417 = vst.msk [vmem:[%s504 + $0x10] sm:$0xf] %vm1080, %v1401
        %1418 = vst.msk [vmem:[%s504 + $0x14] sm:$0xf] %vm1080, %v1402
        %1419 = vst.msk [vmem:[%s504 + $0x18] sm:$0xf] %vm1080, %v1403
        %1420 = vst.msk [vmem:[%s504 + $0x1c] sm:$0xf] %vm1080, %v1404
        %1423 = vrot.lane.b32.xlu0 %v748, 120
        %v1424 = vpop.permute.xlu0 %1423
        %1425 = vrot.lane.b32.xlu0 %v751, 120
        %v1426 = vpop.permute.xlu0 %1425
        %1429 = vrot.lane.b32.xlu0 %v748, 112
        %v1430 = vpop.permute.xlu0 %1429
        %1431 = vrot.lane.b32.xlu0 %v751, 112
        %v1432 = vpop.permute.xlu0 %1431
        %1435 = vrot.lane.b32.xlu0 %v748, 104
        %v1436 = vpop.permute.xlu0 %1435
        %1437 = vrot.lane.b32.xlu0 %v751, 104
        %v1438 = vpop.permute.xlu0 %1437
        %v1441 = vcombine.low %v748, %v1430
        %v1442 = vcombine.high %v748, %v1430
        %v1444 = vunpack.c.l.s4 1983009808
        %v1445 = vunpack.c.0.s8 %v1444
        %v1446 = vlaneseq
        %v1447 = vshrl.u32 %v1446, 7
        %v1448 = vsub.s32 %v1445, %v1447
        %v1449 = vrot.slane %v1441, %v1448
        %v1451 = vunpack.c.l.s4 1983009808
        %v1452 = vunpack.c.0.s8 %v1451
        %v1453 = vlaneseq
        %v1454 = vshrl.u32 %v1453, 7
        %v1455 = vsub.s32 %v1452, %v1454
        %v1456 = vrot.slane %v1442, %v1455
        %v1457 = vcombine.low %v1424, %v1436
        %v1458 = vcombine.high %v1424, %v1436
        %v1460 = vunpack.c.l.s4 1983009808
        %v1461 = vunpack.c.0.s8 %v1460
        %v1462 = vlaneseq
        %v1463 = vshrl.u32 %v1462, 7
        %v1464 = vsub.s32 %v1461, %v1463
        %v1465 = vrot.slane %v1457, %v1464
        %v1467 = vunpack.c.l.s4 1983009808
        %v1468 = vunpack.c.0.s8 %v1467
        %v1469 = vlaneseq
        %v1470 = vshrl.u32 %v1469, 7
        %v1471 = vsub.s32 %v1468, %v1470
        %v1472 = vrot.slane %v1458, %v1471
        %v1473 = vcombine.low %v1449, %v1465
        %v1474 = vcombine.high %v1449, %v1465
        %v1476 = vunpack.c.l.s4 1934713408
        %v1477 = vunpack.c.0.s8 %v1476
        %v1478 = vlaneseq
        %v1479 = vshrl.u32 %v1478, 7
        %v1480 = vsub.s32 %v1477, %v1479
        %v1481 = vrot.slane %v1473, %v1480
        %v1483 = vunpack.c.l.s4 1934713408
        %v1484 = vunpack.c.0.s8 %v1483
        %v1485 = vlaneseq
        %v1486 = vshrl.u32 %v1485, 7
        %v1487 = vsub.s32 %v1484, %v1486
        %v1488 = vrot.slane %v1474, %v1487
        %v1489 = vcombine.low %v1456, %v1472
        %v1490 = vcombine.high %v1456, %v1472
        %v1492 = vunpack.c.l.s4 1934713408
        %v1493 = vunpack.c.0.s8 %v1492
        %v1494 = vlaneseq
        %v1495 = vshrl.u32 %v1494, 7
        %v1496 = vsub.s32 %v1493, %v1495
        %v1497 = vrot.slane %v1489, %v1496
        %v1499 = vunpack.c.l.s4 1934713408
        %v1500 = vunpack.c.0.s8 %v1499
        %v1501 = vlaneseq
        %v1502 = vshrl.u32 %v1501, 7
        %v1503 = vsub.s32 %v1500, %v1502
        %v1504 = vrot.slane %v1490, %v1503
        %v1505 = vcombine.high %v1481, 0.0
        %v1506 = vcombine.high %v1488, 0.0
        %v1507 = vcombine.high %v1497, 0.0
        %v1508 = vcombine.high %v1504, 0.0
        %v1509 = vcombine.low %v751, %v1432
        %v1510 = vcombine.high %v751, %v1432
        %v1512 = vunpack.c.l.s4 1983009808
        %v1513 = vunpack.c.0.s8 %v1512
        %v1514 = vlaneseq
        %v1515 = vshrl.u32 %v1514, 7
        %v1516 = vsub.s32 %v1513, %v1515
        %v1517 = vrot.slane %v1509, %v1516
        %v1519 = vunpack.c.l.s4 1983009808
        %v1520 = vunpack.c.0.s8 %v1519
        %v1521 = vlaneseq
        %v1522 = vshrl.u32 %v1521, 7
        %v1523 = vsub.s32 %v1520, %v1522
        %v1524 = vrot.slane %v1510, %v1523
        %v1525 = vcombine.low %v1426, %v1438
        %v1526 = vcombine.high %v1426, %v1438
        %v1528 = vunpack.c.l.s4 1983009808
        %v1529 = vunpack.c.0.s8 %v1528
        %v1530 = vlaneseq
        %v1531 = vshrl.u32 %v1530, 7
        %v1532 = vsub.s32 %v1529, %v1531
        %v1533 = vrot.slane %v1525, %v1532
        %v1535 = vunpack.c.l.s4 1983009808
        %v1536 = vunpack.c.0.s8 %v1535
        %v1537 = vlaneseq
        %v1538 = vshrl.u32 %v1537, 7
        %v1539 = vsub.s32 %v1536, %v1538
        %v1540 = vrot.slane %v1526, %v1539
        %v1541 = vcombine.low %v1517, %v1533
        %v1542 = vcombine.high %v1517, %v1533
        %v1544 = vunpack.c.l.s4 1934713408
        %v1545 = vunpack.c.0.s8 %v1544
        %v1546 = vlaneseq
        %v1547 = vshrl.u32 %v1546, 7
        %v1548 = vsub.s32 %v1545, %v1547
        %v1549 = vrot.slane %v1541, %v1548
        %v1551 = vunpack.c.l.s4 1934713408
        %v1552 = vunpack.c.0.s8 %v1551
        %v1553 = vlaneseq
        %v1554 = vshrl.u32 %v1553, 7
        %v1555 = vsub.s32 %v1552, %v1554
        %v1556 = vrot.slane %v1542, %v1555
        %v1557 = vcombine.low %v1524, %v1540
        %v1558 = vcombine.high %v1524, %v1540
        %v1560 = vunpack.c.l.s4 1934713408
        %v1561 = vunpack.c.0.s8 %v1560
        %v1562 = vlaneseq
        %v1563 = vshrl.u32 %v1562, 7
        %v1564 = vsub.s32 %v1561, %v1563
        %v1565 = vrot.slane %v1557, %v1564
        %v1567 = vunpack.c.l.s4 1934713408
        %v1568 = vunpack.c.0.s8 %v1567
        %v1569 = vlaneseq
        %v1570 = vshrl.u32 %v1569, 7
        %v1571 = vsub.s32 %v1568, %v1570
        %v1572 = vrot.slane %v1558, %v1571
        %v1573 = vcombine.high %v1549, 0.0
        %v1574 = vcombine.high %v1556, 0.0
        %v1575 = vcombine.high %v1565, 0.0
        %v1576 = vcombine.high %v1572, 0.0
        %v1577 = vcombine.low %v1481, %v1488
        %v1579 = vunpack.c.l.s4 1983009808
        %v1580 = vunpack.c.0.s8 %v1579
        %v1581 = vlaneseq
        %v1582 = vshrl.u32 %v1581, 7
        %v1583 = vsub.s32 %v1580, %v1582
        %v1584 = vrot.slane %v1577, %v1583
        %v1585 = vcombine.low %v1505, %v1506
        %v1587 = vunpack.c.l.s4 1983009808
        %v1588 = vunpack.c.0.s8 %v1587
        %v1589 = vlaneseq
        %v1590 = vshrl.u32 %v1589, 7
        %v1591 = vsub.s32 %v1588, %v1590
        %v1592 = vrot.slane %v1585, %v1591
        %v1593 = vcombine.low %v1497, %v1504
        %v1595 = vunpack.c.l.s4 1983009808
        %v1596 = vunpack.c.0.s8 %v1595
        %v1597 = vlaneseq
        %v1598 = vshrl.u32 %v1597, 7
        %v1599 = vsub.s32 %v1596, %v1598
        %v1600 = vrot.slane %v1593, %v1599
        %v1601 = vcombine.low %v1507, %v1508
        %v1603 = vunpack.c.l.s4 1983009808
        %v1604 = vunpack.c.0.s8 %v1603
        %v1605 = vlaneseq
        %v1606 = vshrl.u32 %v1605, 7
        %v1607 = vsub.s32 %v1604, %v1606
        %v1608 = vrot.slane %v1601, %v1607
        %v1609 = vcombine.low %v1584, %v1592
        %v1610 = vcombine.high %v1584, %v1592
        %v1612 = vunpack.c.l.s4 1934713408
        %v1613 = vunpack.c.0.s8 %v1612
        %v1614 = vlaneseq
        %v1615 = vshrl.u32 %v1614, 7
        %v1616 = vsub.s32 %v1613, %v1615
        %v1617 = vrot.slane %v1609, %v1616
        %v1619 = vunpack.c.l.s4 1934713408
        %v1620 = vunpack.c.0.s8 %v1619
        %v1621 = vlaneseq
        %v1622 = vshrl.u32 %v1621, 7
        %v1623 = vsub.s32 %v1620, %v1622
        %v1624 = vrot.slane %v1610, %v1623
        %v1625 = vcombine.low %v1600, %v1608
        %v1626 = vcombine.high %v1600, %v1608
        %v1628 = vunpack.c.l.s4 1934713408
        %v1629 = vunpack.c.0.s8 %v1628
        %v1630 = vlaneseq
        %v1631 = vshrl.u32 %v1630, 7
        %v1632 = vsub.s32 %v1629, %v1631
        %v1633 = vrot.slane %v1625, %v1632
        %v1635 = vunpack.c.l.s4 1934713408
        %v1636 = vunpack.c.0.s8 %v1635
        %v1637 = vlaneseq
        %v1638 = vshrl.u32 %v1637, 7
        %v1639 = vsub.s32 %v1636, %v1638
        %v1640 = vrot.slane %v1626, %v1639
        %v1641 = vcombine.low %v1617, %v1633
        %v1642 = vcombine.high %v1617, %v1633
        %v1643 = vcombine.low %v1624, %v1640
        %v1644 = vcombine.high %v1624, %v1640
        %v1645 = vcombine.low %v1549, %v1556
        %v1647 = vunpack.c.l.s4 1983009808
        %v1648 = vunpack.c.0.s8 %v1647
        %v1649 = vlaneseq
        %v1650 = vshrl.u32 %v1649, 7
        %v1651 = vsub.s32 %v1648, %v1650
        %v1652 = vrot.slane %v1645, %v1651
        %v1653 = vcombine.low %v1573, %v1574
        %v1655 = vunpack.c.l.s4 1983009808
        %v1656 = vunpack.c.0.s8 %v1655
        %v1657 = vlaneseq
        %v1658 = vshrl.u32 %v1657, 7
        %v1659 = vsub.s32 %v1656, %v1658
        %v1660 = vrot.slane %v1653, %v1659
        %v1661 = vcombine.low %v1565, %v1572
        %v1663 = vunpack.c.l.s4 1983009808
        %v1664 = vunpack.c.0.s8 %v1663
        %v1665 = vlaneseq
        %v1666 = vshrl.u32 %v1665, 7
        %v1667 = vsub.s32 %v1664, %v1666
        %v1668 = vrot.slane %v1661, %v1667
        %v1669 = vcombine.low %v1575, %v1576
        %v1671 = vunpack.c.l.s4 1983009808
        %v1672 = vunpack.c.0.s8 %v1671
        %v1673 = vlaneseq
        %v1674 = vshrl.u32 %v1673, 7
        %v1675 = vsub.s32 %v1672, %v1674
        %v1676 = vrot.slane %v1669, %v1675
        %v1677 = vcombine.low %v1652, %v1660
        %v1678 = vcombine.high %v1652, %v1660
        %v1680 = vunpack.c.l.s4 1934713408
        %v1681 = vunpack.c.0.s8 %v1680
        %v1682 = vlaneseq
        %v1683 = vshrl.u32 %v1682, 7
        %v1684 = vsub.s32 %v1681, %v1683
        %v1685 = vrot.slane %v1677, %v1684
        %v1687 = vunpack.c.l.s4 1934713408
        %v1688 = vunpack.c.0.s8 %v1687
        %v1689 = vlaneseq
        %v1690 = vshrl.u32 %v1689, 7
        %v1691 = vsub.s32 %v1688, %v1690
        %v1692 = vrot.slane %v1678, %v1691
        %v1693 = vcombine.low %v1668, %v1676
        %v1694 = vcombine.high %v1668, %v1676
        %v1696 = vunpack.c.l.s4 1934713408
        %v1697 = vunpack.c.0.s8 %v1696
        %v1698 = vlaneseq
        %v1699 = vshrl.u32 %v1698, 7
        %v1700 = vsub.s32 %v1697, %v1699
        %v1701 = vrot.slane %v1693, %v1700
        %v1703 = vunpack.c.l.s4 1934713408
        %v1704 = vunpack.c.0.s8 %v1703
        %v1705 = vlaneseq
        %v1706 = vshrl.u32 %v1705, 7
        %v1707 = vsub.s32 %v1704, %v1706
        %v1708 = vrot.slane %v1694, %v1707
        %v1709 = vcombine.low %v1685, %v1701
        %v1710 = vcombine.high %v1685, %v1701
        %v1711 = vcombine.low %v1692, %v1708
        %v1712 = vcombine.high %v1692, %v1708
        %v1713 = vpack.c.bf16 %v1709, %v1641
        %v1714 = vpack.c.bf16 %v1710, %v1642
        %v1715 = vpack.c.bf16 %v1711, %v1643
        %v1716 = vpack.c.bf16 %v1712, %v1644
        %v1721 = vunpack.c.l.b16 %v1713
        %v1722 = vunpack.c.h.b16 %v1713
        %v1723 = vunpack.c.l.b16 %v1714
        %v1724 = vunpack.c.h.b16 %v1714
        %v1725 = vunpack.c.l.b16 %v1715
        %v1726 = vunpack.c.h.b16 %v1715
        %v1727 = vunpack.c.l.b16 %v1716
        %v1728 = vunpack.c.h.b16 %v1716
        %v1729 = vpack.c.b16 %v1721, %v1721
        %v1730 = vpack.c.b16 %v1722, %v1722
        %v1731 = vpack.c.b16 %v1723, %v1723
        %v1732 = vpack.c.b16 %v1724, %v1724
        %v1733 = vpack.c.b16 %v1725, %v1725
        %v1734 = vpack.c.b16 %v1726, %v1726
        %v1735 = vpack.c.b16 %v1727, %v1727
        %v1736 = vpack.c.b16 %v1728, %v1728
        %1745 = vst.msk [vmem:[%s511] sm:$0xf] %vm1080, %v1729
        %1746 = vst.msk [vmem:[%s511 + $0x4] sm:$0xf] %vm1080, %v1730
        %1747 = vst.msk [vmem:[%s511 + $0x8] sm:$0xf] %vm1080, %v1731
        %1748 = vst.msk [vmem:[%s511 + $0xc] sm:$0xf] %vm1080, %v1732
        %1749 = vst.msk [vmem:[%s511 + $0x10] sm:$0xf] %vm1080, %v1733
        %1750 = vst.msk [vmem:[%s511 + $0x14] sm:$0xf] %vm1080, %v1734
        %1751 = vst.msk [vmem:[%s511 + $0x18] sm:$0xf] %vm1080, %v1735
        %1752 = vst.msk [vmem:[%s511 + $0x1c] sm:$0xf] %vm1080, %v1736
        %s1753 = sand.u32 %s232, 1
        %s1754 = scalar_lea.sflag [#allocation4], %s1753
        %s1755 = sand.u32 %s232, 1
        %s1756 = smul.addr %s1755, 32
        %s1757 = scalar_lea.vmem [#allocation16], %s1756
        %s1758 = sand.u32 %s35, 1
        %s1759 = scalar_lea.sflag [#allocation18], %s1758
        %s1760 = sand.u32 %s260, 1
        %s1761 = smul.addr %s1760, 32
        %s1762 = scalar_lea.vmem [#allocation17], %s1761
        %s1763 = sand.u32 %s35, 1
        %s1764 = scalar_lea.sflag [#allocation18], %s1763
        %s1765 = sand.u32 %s288, 1
        %s1766 = smul.addr %s1765, 32
        %s1767 = scalar_lea.vmem [#allocation19], %s1766
        // Predicated region
        $region85: #{tpu_custom_call.1} parent=51 // pred_check
          %p1768 = pneg %p242
        $region86: #{tpu_custom_call.1} parent=51 // pred_check_branch
          %1770 = sbr.rel (%p1768) target = $region88
        $region87: #{tpu_custom_call.1} parent=51 // pred_region
          #allocation21 [shape = 'u32[6]{0}', space=smem, size = 0x18, scoped, tag = 'DMA stride descriptor']
          %s1771 = smul.u32 2, %s40
          %s1773 = ssub.s32 512, 512
          %1774 = vsyncadd %s1754, %s1773
          %s1775 = smul.addr %s39, 16
          %s1776 = sadd.s32 %s1771, %s1775
          %s1777 = smul.addr %s1776, 64
          %s1778 = scalar_lea.hbm %s8, %s1777
          %s1780 = sshll.u32 1, 14
          %s1781 = sxor.u32 4294967295, %s1780
          %s1784 = sshll.u32 7, 18
          %s1785 = sxor.u32 4294967295, %s1784
          %s1786 = sand.u32 0, %s1785
          %s1788 = sor.u32 %s1786, 0
          %s1790 = sshll.u32 3, 24
          %s1791 = sxor.u32 4294967295, %s1790
          %s1792 = sand.u32 %s1788, %s1791
          %s1794 = sor.u32 %s1792, 0
          %s1795 = sshll.u32 %s1757, 4
          %s1796 = int_to_ptr.vmem [resolvable:$true] %s1795
          %1802 = sst [smem:[#allocation21]] 128
          %s1803 = scalar_lea.smem [#allocation21], 1
          %1804 = sst [smem:[%s1803]] 256
          %s1805 = scalar_lea.smem [#allocation21], 2
          %1806 = sst [smem:[%s1805]] 2
          %s1807 = scalar_lea.smem [#allocation21], 3
          %1808 = sst [smem:[%s1807]] 64
          %s1809 = scalar_lea.smem [#allocation21], 4
          %1810 = sst [smem:[%s1809]] 64
          %s1811 = scalar_lea.smem [#allocation21], 5
          %1812 = sst [smem:[%s1811]] 4
          %1814 = dma.general %s1796, 512, %s1778, %s1754, [#allocation20], [#allocation21], %s1794, 0
        $region88: #{tpu_custom_call.1} parent=51 // pred_fallthru
          _
        // Predicated region
        $region89: #{tpu_custom_call.1} parent=51 // pred_check
          %p1815 = pneg %p270
        $region90: #{tpu_custom_call.1} parent=51 // pred_check_branch
          %1817 = sbr.rel (%p1815) target = $region92
        $region91: #{tpu_custom_call.1} parent=51 // pred_region
          #allocation23 [shape = 'u32[6]{0}', space=smem, size = 0x18, scoped, tag = 'DMA stride descriptor']
          %s1818 = smul.u32 2, %s40
          %s1820 = ssub.s32 512, 512
          %1821 = vsyncadd %s1759, %s1820
          %s1822 = smul.addr %s39, 16
          %s1823 = sadd.s32 %s1818, %s1822
          %s1824 = smul.addr %s1823, 64
          %s1825 = scalar_lea.hbm %s9, %s1824
          %s1827 = sshll.u32 1, 14
          %s1828 = sxor.u32 4294967295, %s1827
          %s1831 = sshll.u32 7, 18
          %s1832 = sxor.u32 4294967295, %s1831
          %s1833 = sand.u32 0, %s1832
          %s1835 = sor.u32 %s1833, 0
          %s1837 = sshll.u32 3, 24
          %s1838 = sxor.u32 4294967295, %s1837
          %s1839 = sand.u32 %s1835, %s1838
          %s1841 = sor.u32 %s1839, 0
          %s1842 = sshll.u32 %s1762, 4
          %s1843 = int_to_ptr.vmem [resolvable:$true] %s1842
          %1849 = sst [smem:[#allocation23]] 128
          %s1850 = scalar_lea.smem [#allocation23], 1
          %1851 = sst [smem:[%s1850]] 256
          %s1852 = scalar_lea.smem [#allocation23], 2
          %1853 = sst [smem:[%s1852]] 2
          %s1854 = scalar_lea.smem [#allocation23], 3
          %1855 = sst [smem:[%s1854]] 64
          %s1856 = scalar_lea.smem [#allocation23], 4
          %1857 = sst [smem:[%s1856]] 64
          %s1858 = scalar_lea.smem [#allocation23], 5
          %1859 = sst [smem:[%s1858]] 4
          %1861 = dma.general %s1843, 512, %s1825, %s1759, [#allocation22], [#allocation23], %s1841, 0
        $region92: #{tpu_custom_call.1} parent=51 // pred_fallthru
          _
        // Predicated region
        $region93: #{tpu_custom_call.1} parent=51 // pred_check
          %p1862 = pneg %p298
        $region94: #{tpu_custom_call.1} parent=51 // pred_check_branch
          %1864 = sbr.rel (%p1862) target = $region96
        $region95: #{tpu_custom_call.1} parent=51 // pred_region
          #allocation25 [shape = 'u32[6]{0}', space=smem, size = 0x18, scoped, tag = 'DMA stride descriptor']
          %s1865 = smul.u32 2, %s40
          %s1867 = ssub.s32 512, 512
          %1868 = vsyncadd %s1764, %s1867
          %s1869 = smul.addr %s39, 16
          %s1870 = sadd.s32 %s1865, %s1869
          %s1871 = smul.addr %s1870, 64
          %s1872 = scalar_lea.hbm %s10, %s1871
          %s1874 = sshll.u32 1, 14
          %s1875 = sxor.u32 4294967295, %s1874
          %s1878 = sshll.u32 7, 18
          %s1879 = sxor.u32 4294967295, %s1878
          %s1880 = sand.u32 0, %s1879
          %s1882 = sor.u32 %s1880, 0
          %s1884 = sshll.u32 3, 24
          %s1885 = sxor.u32 4294967295, %s1884
          %s1886 = sand.u32 %s1882, %s1885
          %s1888 = sor.u32 %s1886, 0
          %s1889 = sshll.u32 %s1767, 4
          %s1890 = int_to_ptr.vmem [resolvable:$true] %s1889
          %1896 = sst [smem:[#allocation25]] 128
          %s1897 = scalar_lea.smem [#allocation25], 1
          %1898 = sst [smem:[%s1897]] 256
          %s1899 = scalar_lea.smem [#allocation25], 2
          %1900 = sst [smem:[%s1899]] 2
          %s1901 = scalar_lea.smem [#allocation25], 3
          %1902 = sst [smem:[%s1901]] 64
          %s1903 = scalar_lea.smem [#allocation25], 4
          %1904 = sst [smem:[%s1903]] 64
          %s1905 = scalar_lea.smem [#allocation25], 5
          %1906 = sst [smem:[%s1905]] 4
          %1908 = dma.general %s1890, 512, %s1872, %s1764, [#allocation24], [#allocation25], %s1888, 0
        $region96: #{tpu_custom_call.1} parent=51 // pred_fallthru
          _
      $region52: #{tpu_custom_call.1} parent=5 // pred_fallthru
        _
      %p1909 = scmp.le.s32.totalorder 2, %s30
      // Predicated region
      $region97: #{tpu_custom_call.1} parent=5 // pred_check
        %p1910 = pneg %p1909
      $region98: #{tpu_custom_call.1} parent=5 // pred_check_branch
        %1912 = sbr.rel (%p1910) target = $region100
      $region99: #{tpu_custom_call.1} parent=5 // pred_region
        %s1913 = ssub.s32 %s30, 2
        // Predicated region
        $region101: #{tpu_custom_call.1} parent=99 // pred_check
          %p1914 = pneg %p248
        $region102: #{tpu_custom_call.1} parent=99 // pred_check_branch
          %1916 = sbr.rel (%p1914) target = $region104
        $region103: #{tpu_custom_call.1} parent=99 // pred_region
          %s1917 = sand.u32 %s233, 1
          %s1918 = scalar_lea.sflag [#allocation4], %s1917
          %s1919 = sand.u32 %s233, 1
          %s1920 = smul.addr %s1919, 32
          %s1921 = scalar_lea.vmem [#allocation16], %s1920
          %1922 = dma.done %s1918, 512
        $region104: #{tpu_custom_call.1} parent=99 // pred_fallthru
          _
        // Predicated region
        $region105: #{tpu_custom_call.1} parent=99 // pred_check
          %p1923 = pneg %p276
        $region106: #{tpu_custom_call.1} parent=99 // pred_check_branch
          %1925 = sbr.rel (%p1923) target = $region108
        $region107: #{tpu_custom_call.1} parent=99 // pred_region
          %s1926 = sand.u32 %s36, 1
          %s1927 = scalar_lea.sflag [#allocation18], %s1926
          %s1928 = sand.u32 %s261, 1
          %s1929 = smul.addr %s1928, 32
          %s1930 = scalar_lea.vmem [#allocation17], %s1929
          %1931 = dma.done %s1927, 512
        $region108: #{tpu_custom_call.1} parent=99 // pred_fallthru
          _
        // Predicated region
        $region109: #{tpu_custom_call.1} parent=99 // pred_check
          %p1932 = pneg %p304
        $region110: #{tpu_custom_call.1} parent=99 // pred_check_branch
          %1934 = sbr.rel (%p1932) target = $region112
        $region111: #{tpu_custom_call.1} parent=99 // pred_region
          %s1935 = sand.u32 %s36, 1
          %s1936 = scalar_lea.sflag [#allocation18], %s1935
          %s1937 = sand.u32 %s289, 1
          %s1938 = smul.addr %s1937, 32
          %s1939 = scalar_lea.vmem [#allocation19], %s1938
          %1940 = dma.done %s1936, 512
        $region112: #{tpu_custom_call.1} parent=99 // pred_fallthru
          _
      $region100: #{tpu_custom_call.1} parent=5 // pred_fallthru
        _
    $region6: #{tpu_custom_call.1} parent=1 // loop_footer
      %s34 = sadd.s32 1, %s30
    $region7: #{tpu_custom_call.1} parent=1 // loop_footer_branch
      %29 = sbr.rel target = $region3
    $region8: #{tpu_custom_call.1} parent=1 // loop_exit
      _
    %1941 = vsyncpa [#allocation3], 1
    %s1942 = scalar_lea.sflag [#allocation3], 1
    %1943 = vsyncpa %s1942, 1
    %1944 = vsyncpa [#allocation6], 1
    %1945 = vsyncpa [#allocation9], 1
    %1946 = vsyncpa [#allocation12], 1
    %1947 = vsyncpa [#allocation15], 1
    %1948 = vsyncpa [#allocation4], 1
    %s1949 = scalar_lea.sflag [#allocation4], 1
    %1950 = vsyncpa %s1949, 1
    %1951 = vsyncpa [#allocation18], 1
    %s1952 = scalar_lea.sflag [#allocation18], 1
    %1953 = vsyncpa %s1952, 1

</llo_original>
